<compile_context>
chip_gen: v5e
topology: v5e:2x2
jax: 0.10.0
libtpu: 0.0.40
codegen_flags: <defaults>
</compile_context>

<pallas_src>
import functools

import jax
import jax.numpy as jnp
from jax import lax
from jax.experimental import pallas as pl
from jax.experimental.pallas import tpu as pltpu


_MAX_ROWS_TILE = 4096           # cap: 2x(in + lane-padded out) buffers < ~10 MiB f32
_SUB_ROWS = 512                 # in-kernel compute sub-chunk (caps f32 temporaries)
_TARGET_INPUT_BYTES = 3 << 20   # ~3 MiB native-dtype input per (double-)buffer
_PALLAS_MIN_ELEMS = 1 << 17     # below ~1 row-tile of data, fused XLA wins
_PALLAS_MIN_LANES = 64          # F < 64 pads to 128 lanes (>2x wasted DMA) -> XLA


def _round_up(a, m):
    return ((a + m - 1) // m) * m


def _choose_tiling(R, F, itemsize):
    """Pick (rows_tile, sub_rows).

    rows_tile: multiple of 8 (and of _SUB_ROWS when >= _SUB_ROWS), sized for
    ~3 MiB input buffers, capped by _MAX_ROWS_TILE (VMEM), clamped so the grid
    has >= ~4 steps (v7x megacore balance) and never exceeds round_up(R, 8).
    """
    F_pad = _round_up(F, 128)                         # lanes occupied in VMEM
    budget = max(8, _TARGET_INPUT_BYTES // (F_pad * itemsize))
    quarter = _round_up(-(-R // 4), 32)               # keep >= ~4 grid steps
    rows_tile = min(_MAX_ROWS_TILE, budget, quarter, _round_up(R, 8))
    if rows_tile >= _SUB_ROWS:
        rows_tile -= rows_tile % _SUB_ROWS
        sub_rows = _SUB_ROWS
    else:
        rows_tile = max(8, rows_tile - rows_tile % 8)
        sub_rows = rows_tile
    return rows_tile, sub_rows


def _guidance_loss_kernel(x_ref, out_ref, *, sub_rows, inv_f):
    """loss[r] = mean over the flattened (T*D) axis of x[r, :]^2.

    x_ref  : (rows_tile, F) VMEM ref, native dtype (block spans full F)
    out_ref: (rows_tile, 1) VMEM ref, float32
    """
    rows, F = x_ref.shape
    # Hoisted constant: reduction vector for the MXU ones-matvec.
    ones = jnp.ones((F, 1), dtype=jnp.float32)
    # Static sub-chunk loop (fully unrolled at trace time): caps the f32
    # cast/square temporaries at (sub_rows, F) regardless of block size.
    for i in range(rows // sub_rows):
        xi = x_ref[pl.ds(i * sub_rows, sub_rows), :].astype(jnp.float32)
        # Lane reduction on the (otherwise idle) MXU instead of the XLU
        # (binding unit on v7x for small F); result is already the
        # (sub_rows, 1) output column.  Strictly per-row: no row mixing.
        s = jnp.dot(xi * xi, ones,
                    preferred_element_type=jnp.float32,
                    precision=lax.Precision.HIGHEST)
        out_ref[pl.ds(i * sub_rows, sub_rows), :] = s * inv_f


def guidance_loss_pallas(x):
    """x: (B, N, T, D) -> (B, N) float32 mean-squared loss per sample."""
    B, N, T, D = x.shape
    R = B * N
    F = T * D

    xf = x.reshape(R, F)                              # free, contiguous reshape

    rows_tile, sub_rows = _choose_tiling(R, F, x.dtype.itemsize)
    grid = (pl.cdiv(R, rows_tile),)                   # ragged last block: Pallas masks

    kernel = functools.partial(
        _guidance_loss_kernel, sub_rows=sub_rows, inv_f=1.0 / float(F))

    out = pl.pallas_call(
        kernel,
        out_shape=jax.ShapeDtypeStruct((R, 1), jnp.float32),
        grid=grid,
        in_specs=[pl.BlockSpec((rows_tile, F), lambda i: (i, 0))],
        out_specs=pl.BlockSpec((rows_tile, 1), lambda i: (i, 0)),
        compiler_params=pltpu.CompilerParams(
            dimension_semantics=("parallel",)         # megacore sharding on v7x
        ),
        cost_estimate=pl.CostEstimate(
            flops=2 * R * F,
            transcendentals=0,
            bytes_accessed=R * F * x.dtype.itemsize + R * 4,
        ),
    )(xf)

    return out[:, 0].reshape(B, N)


class GuidanceLoss:
    """JAX/Pallas port of the abstract GuidanceLoss module.

    Guidance seeks to MINIMIZE this function.  forward() returns a (B, N)
    loss; the final scalar loss is the mean of that array.
    """

    def __init__(self):
        self.global_t = 0

    def init_for_batch(self, example_batch):
        # No per-batch caching needed for the synthetic default loss.
        pass

    def update(self, global_t=None):
        if global_t is not None:
            self.global_t = global_t

    def forward(self, x, data_batch=None, agt_mask=None):
        """
        Inputs:
        - x : (B, N, T, 6) current trajectory samples
        - data_batch : unused by the base-class default loss
        - agt_mask : optional (B,) boolean mask; if given, only masked batch
          entries contribute (others are zeroed), matching "applies to ALL
          agents if None".
        Output:
        - loss : (B, N) float32
        """
        x = jnp.asarray(x)
        B, N, T, D = x.shape
        if x.size < _PALLAS_MIN_ELEMS or T * D < _PALLAS_MIN_LANES:
            # Tiny inputs / tiny lane extent: fused XLA reduction beats the
            # kernel's launch cost / lane-padding waste.
            loss = jnp.mean(x.astype(jnp.float32) ** 2, axis=(2, 3))
        else:
            loss = guidance_loss_pallas(x)
        if agt_mask is not None:
            mask = jnp.asarray(agt_mask, dtype=jnp.float32)[:, None]  # (B, 1)
            loss = loss * mask
        return loss

    __call__ = forward


if __name__ == "__main__":
    key = jax.random.PRNGKey(0)
    k0, k1, k2, k3 = jax.random.split(key, 4)

    loss_fn = GuidanceLoss()
    loss_fn.init_for_batch(example_batch=None)
    loss_fn.update(global_t=1)

    D = 6

    # 1) Tiny module-level check (XLA fast path: F=48 < 64 lanes, tiny size).
    B, N, T = 2, 4, 8
    x_small = jax.random.normal(k0, (B, N, T, D), dtype=jnp.float32)
    loss_small = jax.block_until_ready(loss_fn(x_small))
    ref_small = jnp.mean(x_small.astype(jnp.float32) ** 2, axis=(2, 3))
    assert loss_small.shape == (B, N)
    assert jnp.allclose(loss_small, ref_small, atol=1e-5, rtol=1e-5)

    # 2) Pallas path, ragged grid: R=1200 rows -> rows_tile=320, 4 grid steps,
    #    last block partially out-of-bounds (exercises Pallas OOB masking).
    #    Tolerance allows for possible reduced-precision MXU passes on the
    #    in-kernel ones-matvec reduce.
    B2, N2, T2 = 6, 200, 20
    x_big = jax.random.normal(k1, (B2, N2, T2, D), dtype=jnp.float32)
    loss_big = jax.block_until_ready(guidance_loss_pallas(x_big))
    ref_big = jnp.mean(x_big.astype(jnp.float32) ** 2, axis=(2, 3))
    assert loss_big.shape == (B2, N2)
    assert jnp.allclose(loss_big, ref_big, atol=1e-3, rtol=1e-3)

    # 3) Pallas path, multi-sub-chunk kernel loop: R=4096 -> rows_tile=1024,
    #    sub_rows=512 (2 in-kernel sub-chunks), grid of 4.
    B3, N3, T3 = 8, 512, 20
    x_mid = jax.random.normal(k2, (B3, N3, T3, D), dtype=jnp.float32)
    loss_mid = jax.block_until_ready(guidance_loss_pallas(x_mid))
    ref_mid = jnp.mean(x_mid.astype(jnp.float32) ** 2, axis=(2, 3))
    assert loss_mid.shape == (B3, N3)
    assert jnp.allclose(loss_mid, ref_mid, atol=1e-3, rtol=1e-3)

    # 4) bf16 input: DMA'd natively, cast to f32 inside the kernel.
    x_bf16 = jax.random.normal(k3, (B2, N2, T2, D), dtype=jnp.bfloat16)
    loss_bf16 = jax.block_until_ready(guidance_loss_pallas(x_bf16))
    ref_bf16 = jnp.mean(x_bf16.astype(jnp.float32) ** 2, axis=(2, 3))
    assert jnp.allclose(loss_bf16, ref_bf16, atol=2e-3, rtol=2e-3)

    # 5) agt_mask path through the module wrapper (uses the Pallas path).
    mask = jnp.array([True, False, True, True, False, True])
    loss_masked = jax.block_until_ready(loss_fn(x_big, agt_mask=mask))
    ref_masked = ref_big * mask.astype(jnp.float32)[:, None]
    assert jnp.allclose(loss_masked, ref_masked, atol=1e-3, rtol=1e-3)

    print("KERNEL_OK")
</pallas_src>

<mosaic_0001>
module attributes {stable_mosaic.version = 11 : i64} {
  func.func @_guidance_loss_kernel(%arg0: i32, %arg1: memref<320x120xf32, #tpu.memory_space<vmem>>, %arg2: memref<320x1xf32, #tpu.memory_space<vmem>>) attributes {dimension_semantics = [#tpu.dimension_semantics<parallel>], iteration_bounds = array<i64: 4>, scalar_prefetch = 0 : i64, scratch_operands = 0 : i64, tpu.core_type = #tpu.core_type<tc>, window_params = [{transform_indices = @transform_0, window_bounds = array<i64: 320, 120>}, {transform_indices = @transform_1, window_bounds = array<i64: 320, 1>}]} {
    %cst = arith.constant 1.000000e+00 : f32
    %0 = vector.broadcast %cst : f32 to vector<120x1xf32>
    %c0 = arith.constant 0 : index
    %c0_0 = arith.constant 0 : index
    %1 = vector.load %arg1[%c0, %c0_0] : memref<320x120xf32, #tpu.memory_space<vmem>>, vector<320x120xf32>
    %2 = arith.mulf %1, %1 : vector<320x120xf32>
    %cst_1 = arith.constant dense<0.000000e+00> : vector<320x1xf32>
    %3 = tpu.matmul %2, %0, %cst_1 {dimension_numbers = #tpu.dot_dimension_numbers<[1], [0], [0], [1], [0, 0, 1, 1], [], []>, precision = #tpu.contract_precision<fp32>} : vector<320x120xf32>, vector<120x1xf32>, vector<320x1xf32> -> vector<320x1xf32>
    %cst_2 = arith.constant 0.00833333377 : f32
    %4 = vector.broadcast %cst_2 : f32 to vector<320x1xf32>
    %5 = arith.mulf %3, %4 : vector<320x1xf32>
    %c0_3 = arith.constant 0 : index
    %c0_4 = arith.constant 0 : index
    %6 = vector.load %arg2[%c0_3, %c0_4] : memref<320x1xf32, #tpu.memory_space<vmem>>, vector<320x1xf32>
    tpu.vector_store %arg2[%c0_3, %c0_4], %5 {strides = array<i32>} : memref<320x1xf32, #tpu.memory_space<vmem>>, vector<320x1xf32>,
    return
  }
  func.func @transform_0(%arg0: i32) -> (i32, i32) {
    %c0_i32 = arith.constant 0 : i32
    %c0_i32_0 = arith.constant 0 : i32
    return %arg0, %c0_i32 : i32, i32
  }
  func.func @transform_1(%arg0: i32) -> (i32, i32) {
    %c0_i32 = arith.constant 0 : i32
    %c0_i32_0 = arith.constant 0 : i32
    return %arg0, %c0_i32 : i32, i32
  }
}

</mosaic_0001>

<llo_original>
// kernel: tpu_custom_call.1
$region0: #{tpu_custom_call.1}
  #allocation0 [shape = 'u32[]', space=smem, size = 0x4, offset = 0x4, fixed_abs, tag = 'smem constant byte address 0x4 - core index']
  #allocation1 [shape = 'u32[72,128]{1,0:T(1,128)}', space=vmem, size = 0x9000, scoped, tag = 'internal scratch']
  %s0 = inlined_call_operand.hbm [shape: f32[1200,120], index: 0, kind: input, shape index: {}]
  %s1 = inlined_call_operand.vmem [shape: f32[1200,1], index: 1, kind: output, shape index: {}]
  %s2 = sld [smem:[#allocation0]]
  $region89: #{tpu_custom_call.1} parent=0
    _
  %s4 = ssub.s32 1, %s2
  %s5 = scalar_select 0, %s4, %s2
  $region1: #{tpu_custom_call.1} parent=0
    #allocation2 [shape = 'u8[327680]{0}', space=vmem, size = 0x50000, scoped, tag = 'input window, operand 0']
    #allocation3 [shape = 's32[2]{0}', space=sflag, size = 0x8, scoped, tag = 'scoped memory for tpu_custom_call.1']
    #allocation4 [shape = 'u8[327680]{0}', space=vmem, size = 0x50000, scoped, tag = 'output window, operand 0']
    %6 = vsyncpa [#allocation3], 0
    %s7 = scalar_lea.sflag [#allocation3], 1
    %8 = vsyncpa %s7, 0
    loop: start=0, step=1, limit=6
    $region2: #{tpu_custom_call.1} parent=1 // loop_pre_header
      _
    $region3: #{tpu_custom_call.1} parent=1 // loop_header
      %s10 = sphi 0, %s14
      %p11 = scmp.ge.s32.totalorder %s10, 6
      %s20 = sphi 0, %s22
      %s23 = sphi 0, %s20
      %s24 = sphi 0, %s23
      %s40 = sphi 0, %s24
      %s46 = sphi 0, %s48
      %s49 = sphi 0, %s46
      %s50 = sphi 0, %s49
      %s66 = sphi 0, %s50
    $region4: #{tpu_custom_call.1} parent=1 // loop_header_branch
      %13 = sbr.rel (%p11) target = $region8
    $region5: #{tpu_custom_call.1} parent=1 // loop_body
      %s15 = ssub.s32 %s10, 1
      %s16 = ssub.s32 %s10, 2
      %s17 = sadd.s32 %s10, 1
      %s18 = ssub.s32 %s10, %s17
      %p19 = scmp.eq.s32.totalorder %s18, 0
      %s21 = sadd.s32 %s20, 1
      %s22 = scalar_select %p19, %s20, %s21
      %p25 = pneg %p19
      %p26 = scmp.eq.s32.totalorder %s10, 3
      %p27 = por %p25, %p26
      %p28 = scmp.ne.s32.totalorder %s20, %s23
      %p29 = scmp.eq.s32.totalorder %s10, 0
      %p30 = por %p28, %p29
      %p31 = scmp.ne.s32.totalorder %s20, %s23
      %p32 = scmp.eq.s32.totalorder %s15, 3
      %p33 = por %p31, %p32
      %p34 = scmp.ne.s32.totalorder %s23, %s24
      %p35 = scmp.eq.s32.totalorder %s15, 0
      %p36 = por %p34, %p35
      %p37 = scmp.ne.s32.totalorder %s23, %s24
      %p38 = scmp.eq.s32.totalorder %s16, 3
      %p39 = por %p37, %p38
      %p41 = scmp.ne.s32.totalorder %s24, %s40
      %p42 = scmp.eq.s32.totalorder %s16, 0
      %p43 = por %p41, %p42
      %s44 = ssub.s32 %s10, %s17
      %p45 = scmp.eq.s32.totalorder %s44, 0
      %s47 = sadd.s32 %s46, 1
      %s48 = scalar_select %p45, %s46, %s47
      %p51 = pneg %p45
      %p52 = scmp.eq.s32.totalorder %s10, 3
      %p53 = por %p51, %p52
      %p54 = scmp.ne.s32.totalorder %s46, %s49
      %p55 = scmp.eq.s32.totalorder %s10, 0
      %p56 = por %p54, %p55
      %p57 = scmp.ne.s32.totalorder %s46, %s49
      %p58 = scmp.eq.s32.totalorder %s15, 3
      %p59 = por %p57, %p58
      %p60 = scmp.ne.s32.totalorder %s49, %s50
      %p61 = scmp.eq.s32.totalorder %s15, 0
      %p62 = por %p60, %p61
      %p63 = scmp.ne.s32.totalorder %s49, %s50
      %p64 = scmp.eq.s32.totalorder %s16, 3
      %p65 = por %p63, %p64
      %p67 = scmp.ne.s32.totalorder %s50, %s66
      %p68 = scmp.eq.s32.totalorder %s16, 0
      %p69 = por %p67, %p68
      %p70 = scmp.le.s32.totalorder 1, %s10
      %p71 = scmp.lt.s32.totalorder %s10, 5
      %p72 = pnand %p70, %p71
      %p73 = pneg %p72
      // Predicated region
      $region9: #{tpu_custom_call.1} parent=5 // pred_check
        _
      $region10: #{tpu_custom_call.1} parent=5 // pred_check_branch
        %75 = sbr.rel (%p72) target = $region12
      $region11: #{tpu_custom_call.1} parent=5 // pred_region
        %s76 = ssub.s32 %s10, 1
      $region12: #{tpu_custom_call.1} parent=5 // pred_fallthru
        _
      %p77 = scmp.lt.s32.totalorder %s10, 4
      // Predicated region
      $region13: #{tpu_custom_call.1} parent=5 // pred_check
        %p78 = pneg %p77
      $region14: #{tpu_custom_call.1} parent=5 // pred_check_branch
        %80 = sbr.rel (%p78) target = $region16
      $region15: #{tpu_custom_call.1} parent=5 // pred_region
        // Predicated region
        $region17: #{tpu_custom_call.1} parent=15 // pred_check
          %p81 = pneg %p30
        $region18: #{tpu_custom_call.1} parent=15 // pred_check_branch
          %83 = sbr.rel (%p81) target = $region20
        $region19: #{tpu_custom_call.1} parent=15 // pred_region
          %s84 = sand.u32 %s20, 1
          %s85 = scalar_lea.sflag [#allocation3], %s84
          %s86 = sand.u32 %s20, 1
          %s87 = smul.addr %s86, 320
          %s88 = scalar_lea.vmem [#allocation2], %s87
          %s89 = smul.u32 40, %s10
          %s90 = ssub.s32 150, %s89
          %p91 = scmp.lt.s32.totalorder %s90, 40
          %s92 = scalar_select %p91, %s90, 40
          %s93 = smul.u32 8, %s92
          %s94 = ssub.s32 320, %s93
          %s95 = sshll.u32 %s94, 4
          %96 = vsyncadd %s85, %s95
          %p97 = scmp.ne.s32.totalorder 0, %s93
          %s98 = smul.addr %s89, 8
          %s99 = scalar_lea.hbm %s0, %s98
          %s100 = smul.u32 8, %s92
          %s101 = sshll.u32 %s99, 4
          %s102 = int_to_ptr.hbm [resolvable:$true] %s101
          %s103 = sshll.u32 %s88, 4
          %s104 = int_to_ptr.vmem [resolvable:$true] %s103
          %s105 = sshll.u32 %s100, 4
          %109 = dma.hbm_to_vmem [thread:$0]  (%p97), %s102, %s105, %s104, %s85, 128, 128, 8
        $region20: #{tpu_custom_call.1} parent=15 // pred_fallthru
          _
      $region16: #{tpu_custom_call.1} parent=5 // pred_fallthru
        _
      %p110 = scmp.le.s32.totalorder 1, %s10
      %p111 = scmp.lt.s32.totalorder %s10, 5
      %p112 = pnand %p110, %p111
      %p113 = pneg %p112
      // Predicated region
      $region21: #{tpu_custom_call.1} parent=5 // pred_check
        _
      $region22: #{tpu_custom_call.1} parent=5 // pred_check_branch
        %115 = sbr.rel (%p112) target = $region24
      $region23: #{tpu_custom_call.1} parent=5 // pred_region
        %s116 = ssub.s32 %s10, 1
        %s117 = sand.u32 %s23, 1
        %s118 = scalar_lea.sflag [#allocation3], %s117
        %s119 = sand.u32 %s23, 1
        %s120 = smul.addr %s119, 320
        %s121 = scalar_lea.vmem [#allocation2], %s120
        // Predicated region
        $region25: #{tpu_custom_call.1} parent=23 // pred_check
          %p122 = pneg %p36
        $region26: #{tpu_custom_call.1} parent=23 // pred_check_branch
          %124 = sbr.rel (%p122) target = $region28
        $region27: #{tpu_custom_call.1} parent=23 // pred_region
          %126 = dma.done %s118, 5120
        $region28: #{tpu_custom_call.1} parent=23 // pred_fallthru
          _
        %s127 = sand.u32 %s23, 1
        %s128 = scalar_lea.sflag [#allocation3], %s127
        %s129 = sand.u32 %s23, 1
        %s130 = smul.addr %s129, 320
        %s131 = scalar_lea.vmem [#allocation2], %s130
        %p132 = pneg %p36
        %p133 = pneg %p33
        %p134 = pneg %p62
        %p135 = pneg %p59
        %s136 = sand.u32 %s49, 1
        %s137 = sand.u32 %s49, 1
        %s138 = smul.addr %s137, 320
        %s139 = scalar_lea.vmem [#allocation4], %s138
        %s140 = smul.u32 40, %s15
        %s141 = ssub.s32 150, %s140
        %p142 = scmp.lt.s32.totalorder %s141, 40
        %s143 = scalar_select %p142, %s141, 40
        %s144 = smul.u32 8, %s143
        %s145 = smul.u32 40, %s15
        %s146 = ssub.s32 150, %s145
        %p147 = scmp.lt.s32.totalorder %s146, 40
        %s148 = scalar_select %p147, %s146, 40
        %s149 = smul.u32 8, %s148
        %v150 = vld [vmem:[%s121] sm:$0xff]
        %v151 = vld [vmem:[%s121 + $0x8] sm:$0xff]
        %v152 = vld [vmem:[%s121 + $0x10] sm:$0xff]
        %v153 = vld [vmem:[%s121 + $0x18] sm:$0xff]
        %v154 = vld [vmem:[%s121 + $0x20] sm:$0xff]
        %v155 = vld [vmem:[%s121 + $0x28] sm:$0xff]
        %v156 = vld [vmem:[%s121 + $0x30] sm:$0xff]
        %v157 = vld [vmem:[%s121 + $0x38] sm:$0xff]
        %v158 = vld [vmem:[%s121 + $0x40] sm:$0xff]
        %v159 = vld [vmem:[%s121 + $0x48] sm:$0xff]
        %v160 = vld [vmem:[%s121 + $0x50] sm:$0xff]
        %v161 = vld [vmem:[%s121 + $0x58] sm:$0xff]
        %v162 = vld [vmem:[%s121 + $0x60] sm:$0xff]
        %v163 = vld [vmem:[%s121 + $0x68] sm:$0xff]
        %v164 = vld [vmem:[%s121 + $0x70] sm:$0xff]
        %v165 = vld [vmem:[%s121 + $0x78] sm:$0xff]
        %v166 = vld [vmem:[%s121 + $0x80] sm:$0xff]
        %v167 = vld [vmem:[%s121 + $0x88] sm:$0xff]
        %v168 = vld [vmem:[%s121 + $0x90] sm:$0xff]
        %v169 = vld [vmem:[%s121 + $0x98] sm:$0xff]
        %v170 = vld [vmem:[%s121 + $0xa0] sm:$0xff]
        %v171 = vld [vmem:[%s121 + $0xa8] sm:$0xff]
        %v172 = vld [vmem:[%s121 + $0xb0] sm:$0xff]
        %v173 = vld [vmem:[%s121 + $0xb8] sm:$0xff]
        %v174 = vld [vmem:[%s121 + $0xc0] sm:$0xff]
        %v175 = vld [vmem:[%s121 + $0xc8] sm:$0xff]
        %v176 = vld [vmem:[%s121 + $0xd0] sm:$0xff]
        %v177 = vld [vmem:[%s121 + $0xd8] sm:$0xff]
        %v178 = vld [vmem:[%s121 + $0xe0] sm:$0xff]
        %v179 = vld [vmem:[%s121 + $0xe8] sm:$0xff]
        %v180 = vld [vmem:[%s121 + $0xf0] sm:$0xff]
        %v181 = vld [vmem:[%s121 + $0xf8] sm:$0xff]
        %v182 = vld [vmem:[%s121 + $0x100] sm:$0xff]
        %v183 = vld [vmem:[%s121 + $0x108] sm:$0xff]
        %v184 = vld [vmem:[%s121 + $0x110] sm:$0xff]
        %v185 = vld [vmem:[%s121 + $0x118] sm:$0xff]
        %v186 = vld [vmem:[%s121 + $0x120] sm:$0xff]
        %v187 = vld [vmem:[%s121 + $0x128] sm:$0xff]
        %v188 = vld [vmem:[%s121 + $0x130] sm:$0xff]
        %v189 = vld [vmem:[%s121 + $0x138] sm:$0xff]
        %v190 = vmul.f32 %v150, %v150
        %v191 = vmul.f32 %v151, %v151
        %v192 = vmul.f32 %v152, %v152
        %v193 = vmul.f32 %v153, %v153
        %v194 = vmul.f32 %v154, %v154
        %v195 = vmul.f32 %v155, %v155
        %v196 = vmul.f32 %v156, %v156
        %v197 = vmul.f32 %v157, %v157
        %v198 = vmul.f32 %v158, %v158
        %v199 = vmul.f32 %v159, %v159
        %v200 = vmul.f32 %v160, %v160
        %v201 = vmul.f32 %v161, %v161
        %v202 = vmul.f32 %v162, %v162
        %v203 = vmul.f32 %v163, %v163
        %v204 = vmul.f32 %v164, %v164
        %v205 = vmul.f32 %v165, %v165
        %v206 = vmul.f32 %v166, %v166
        %v207 = vmul.f32 %v167, %v167
        %v208 = vmul.f32 %v168, %v168
        %v209 = vmul.f32 %v169, %v169
        %v210 = vmul.f32 %v170, %v170
        %v211 = vmul.f32 %v171, %v171
        %v212 = vmul.f32 %v172, %v172
        %v213 = vmul.f32 %v173, %v173
        %v214 = vmul.f32 %v174, %v174
        %v215 = vmul.f32 %v175, %v175
        %v216 = vmul.f32 %v176, %v176
        %v217 = vmul.f32 %v177, %v177
        %v218 = vmul.f32 %v178, %v178
        %v219 = vmul.f32 %v179, %v179
        %v220 = vmul.f32 %v180, %v180
        %v221 = vmul.f32 %v181, %v181
        %v222 = vmul.f32 %v182, %v182
        %v223 = vmul.f32 %v183, %v183
        %v224 = vmul.f32 %v184, %v184
        %v225 = vmul.f32 %v185, %v185
        %v226 = vmul.f32 %v186, %v186
        %v227 = vmul.f32 %v187, %v187
        %v228 = vmul.f32 %v188, %v188
        %v229 = vmul.f32 %v189, %v189
        %vm230 = vcmask 982016
        %v232 = vsel %vm230, %v190, 0
        %v235 = vsel %vm230, %v191, 0
        %v238 = vsel %vm230, %v192, 0
        %v241 = vsel %vm230, %v193, 0
        %v244 = vsel %vm230, %v194, 0
        %v247 = vsel %vm230, %v195, 0
        %v250 = vsel %vm230, %v196, 0
        %v253 = vsel %vm230, %v197, 0
        %v256 = vsel %vm230, %v198, 0
        %v259 = vsel %vm230, %v199, 0
        %v262 = vsel %vm230, %v200, 0
        %v265 = vsel %vm230, %v201, 0
        %v268 = vsel %vm230, %v202, 0
        %v271 = vsel %vm230, %v203, 0
        %v274 = vsel %vm230, %v204, 0
        %v277 = vsel %vm230, %v205, 0
        %v280 = vsel %vm230, %v206, 0
        %v283 = vsel %vm230, %v207, 0
        %v286 = vsel %vm230, %v208, 0
        %v289 = vsel %vm230, %v209, 0
        %v292 = vsel %vm230, %v210, 0
        %v295 = vsel %vm230, %v211, 0
        %v298 = vsel %vm230, %v212, 0
        %v301 = vsel %vm230, %v213, 0
        %v304 = vsel %vm230, %v214, 0
        %v307 = vsel %vm230, %v215, 0
        %v310 = vsel %vm230, %v216, 0
        %v313 = vsel %vm230, %v217, 0
        %v316 = vsel %vm230, %v218, 0
        %v319 = vsel %vm230, %v219, 0
        %v322 = vsel %vm230, %v220, 0
        %v325 = vsel %vm230, %v221, 0
        %v328 = vsel %vm230, %v222, 0
        %v331 = vsel %vm230, %v223, 0
        %v334 = vsel %vm230, %v224, 0
        %v337 = vsel %vm230, %v225, 0
        %v340 = vsel %vm230, %v226, 0
        %v343 = vsel %vm230, %v227, 0
        %v346 = vsel %vm230, %v228, 0
        %v349 = vsel %vm230, %v229, 0
        %351 = vmatpush.msra.mxu0 0.0
        %352 = vmatpush.msra.mxu0 1.0
        %353 = vmatpush.msra.mxu0 1.0
        %354 = vmatpush.msra.mxu0 1.0
        %355 = vmatpush.msra.mxu0 1.0
        %356 = vmatpush.msra.mxu0 1.0
        %357 = vmatpush.msra.mxu0 1.0
        %358 = vmatpush.msra.mxu0 1.0
        %359 = vmatpush.msra.mxu0 1.0
        %360 = vmatpush.msra.mxu0 1.0
        %361 = vmatpush.msra.mxu0 1.0
        %362 = vmatpush.msra.mxu0 1.0
        %363 = vmatpush.msra.mxu0 1.0
        %364 = vmatpush.msra.mxu0 1.0
        %365 = vmatpush.msra.mxu0 1.0
        %366 = vmatpush.msra.mxu0 1.0
        %v367 = vand.u32 %v232, 4294901760
        %v368 = vsub.f32 %v232, %v367
        %v369 = vand.u32 %v368, 4294901760
        %v370 = vsub.f32 %v368, %v369
        %v371 = vand.u32 %v370, 4294901760
        %372 = vmatmul.f32.gmra.mxu0 %v371
        %v373 = vpop.f32.mrf.mxu0
        %v374 = vadd.f32 0.0, %v373
        %v375 = vand.u32 %v235, 4294901760
        %v376 = vsub.f32 %v235, %v375
        %v377 = vand.u32 %v376, 4294901760
        %v378 = vsub.f32 %v376, %v377
        %v379 = vand.u32 %v378, 4294901760
        %380 = vmatmul.f32.gmra.mxu0 %v379
        %v381 = vpop.f32.mrf.mxu0
        %v382 = vadd.f32 0.0, %v381
        %v383 = vand.u32 %v238, 4294901760
        %v384 = vsub.f32 %v238, %v383
        %v385 = vand.u32 %v384, 4294901760
        %v386 = vsub.f32 %v384, %v385
        %v387 = vand.u32 %v386, 4294901760
        %388 = vmatmul.f32.gmra.mxu0 %v387
        %v389 = vpop.f32.mrf.mxu0
        %v390 = vadd.f32 0.0, %v389
        %v391 = vand.u32 %v241, 4294901760
        %v392 = vsub.f32 %v241, %v391
        %v393 = vand.u32 %v392, 4294901760
        %v394 = vsub.f32 %v392, %v393
        %v395 = vand.u32 %v394, 4294901760
        %396 = vmatmul.f32.gmra.mxu0 %v395
        %v397 = vpop.f32.mrf.mxu0
        %v398 = vadd.f32 0.0, %v397
        %v399 = vand.u32 %v244, 4294901760
        %v400 = vsub.f32 %v244, %v399
        %v401 = vand.u32 %v400, 4294901760
        %v402 = vsub.f32 %v400, %v401
        %v403 = vand.u32 %v402, 4294901760
        %404 = vmatmul.f32.gmra.mxu0 %v403
        %v405 = vpop.f32.mrf.mxu0
        %v406 = vadd.f32 0.0, %v405
        %v407 = vand.u32 %v247, 4294901760
        %v408 = vsub.f32 %v247, %v407
        %v409 = vand.u32 %v408, 4294901760
        %v410 = vsub.f32 %v408, %v409
        %v411 = vand.u32 %v410, 4294901760
        %412 = vmatmul.f32.gmra.mxu0 %v411
        %v413 = vpop.f32.mrf.mxu0
        %v414 = vadd.f32 0.0, %v413
        %v415 = vand.u32 %v250, 4294901760
        %v416 = vsub.f32 %v250, %v415
        %v417 = vand.u32 %v416, 4294901760
        %v418 = vsub.f32 %v416, %v417
        %v419 = vand.u32 %v418, 4294901760
        %420 = vmatmul.f32.gmra.mxu0 %v419
        %v421 = vpop.f32.mrf.mxu0
        %v422 = vadd.f32 0.0, %v421
        %v423 = vand.u32 %v253, 4294901760
        %v424 = vsub.f32 %v253, %v423
        %v425 = vand.u32 %v424, 4294901760
        %v426 = vsub.f32 %v424, %v425
        %v427 = vand.u32 %v426, 4294901760
        %428 = vmatmul.f32.gmra.mxu0 %v427
        %v429 = vpop.f32.mrf.mxu0
        %v430 = vadd.f32 0.0, %v429
        %v431 = vand.u32 %v256, 4294901760
        %v432 = vsub.f32 %v256, %v431
        %v433 = vand.u32 %v432, 4294901760
        %v434 = vsub.f32 %v432, %v433
        %v435 = vand.u32 %v434, 4294901760
        %436 = vmatmul.f32.gmra.mxu0 %v435
        %v437 = vpop.f32.mrf.mxu0
        %v438 = vadd.f32 0.0, %v437
        %v439 = vand.u32 %v259, 4294901760
        %v440 = vsub.f32 %v259, %v439
        %v441 = vand.u32 %v440, 4294901760
        %v442 = vsub.f32 %v440, %v441
        %v443 = vand.u32 %v442, 4294901760
        %444 = vmatmul.f32.gmra.mxu0 %v443
        %v445 = vpop.f32.mrf.mxu0
        %v446 = vadd.f32 0.0, %v445
        %v447 = vand.u32 %v262, 4294901760
        %v448 = vsub.f32 %v262, %v447
        %v449 = vand.u32 %v448, 4294901760
        %v450 = vsub.f32 %v448, %v449
        %v451 = vand.u32 %v450, 4294901760
        %452 = vmatmul.f32.gmra.mxu0 %v451
        %v453 = vpop.f32.mrf.mxu0
        %v454 = vadd.f32 0.0, %v453
        %v455 = vand.u32 %v265, 4294901760
        %v456 = vsub.f32 %v265, %v455
        %v457 = vand.u32 %v456, 4294901760
        %v458 = vsub.f32 %v456, %v457
        %v459 = vand.u32 %v458, 4294901760
        %460 = vmatmul.f32.gmra.mxu0 %v459
        %v461 = vpop.f32.mrf.mxu0
        %v462 = vadd.f32 0.0, %v461
        %v463 = vand.u32 %v268, 4294901760
        %v464 = vsub.f32 %v268, %v463
        %v465 = vand.u32 %v464, 4294901760
        %v466 = vsub.f32 %v464, %v465
        %v467 = vand.u32 %v466, 4294901760
        %468 = vmatmul.f32.gmra.mxu0 %v467
        %v469 = vpop.f32.mrf.mxu0
        %v470 = vadd.f32 0.0, %v469
        %v471 = vand.u32 %v271, 4294901760
        %v472 = vsub.f32 %v271, %v471
        %v473 = vand.u32 %v472, 4294901760
        %v474 = vsub.f32 %v472, %v473
        %v475 = vand.u32 %v474, 4294901760
        %476 = vmatmul.f32.gmra.mxu0 %v475
        %v477 = vpop.f32.mrf.mxu0
        %v478 = vadd.f32 0.0, %v477
        %v479 = vand.u32 %v274, 4294901760
        %v480 = vsub.f32 %v274, %v479
        %v481 = vand.u32 %v480, 4294901760
        %v482 = vsub.f32 %v480, %v481
        %v483 = vand.u32 %v482, 4294901760
        %484 = vmatmul.f32.gmra.mxu0 %v483
        %v485 = vpop.f32.mrf.mxu0
        %v486 = vadd.f32 0.0, %v485
        %v487 = vand.u32 %v277, 4294901760
        %v488 = vsub.f32 %v277, %v487
        %v489 = vand.u32 %v488, 4294901760
        %v490 = vsub.f32 %v488, %v489
        %v491 = vand.u32 %v490, 4294901760
        %492 = vmatmul.f32.gmra.mxu0 %v491
        %v493 = vpop.f32.mrf.mxu0
        %v494 = vadd.f32 0.0, %v493
        %v495 = vand.u32 %v280, 4294901760
        %v496 = vsub.f32 %v280, %v495
        %v497 = vand.u32 %v496, 4294901760
        %v498 = vsub.f32 %v496, %v497
        %v499 = vand.u32 %v498, 4294901760
        %500 = vmatmul.f32.gmra.mxu0 %v499
        %v501 = vpop.f32.mrf.mxu0
        %v502 = vadd.f32 0.0, %v501
        %v503 = vand.u32 %v283, 4294901760
        %v504 = vsub.f32 %v283, %v503
        %v505 = vand.u32 %v504, 4294901760
        %v506 = vsub.f32 %v504, %v505
        %v507 = vand.u32 %v506, 4294901760
        %508 = vmatmul.f32.gmra.mxu0 %v507
        %v509 = vpop.f32.mrf.mxu0
        %v510 = vadd.f32 0.0, %v509
        %v511 = vand.u32 %v286, 4294901760
        %v512 = vsub.f32 %v286, %v511
        %v513 = vand.u32 %v512, 4294901760
        %v514 = vsub.f32 %v512, %v513
        %v515 = vand.u32 %v514, 4294901760
        %516 = vmatmul.f32.gmra.mxu0 %v515
        %v517 = vpop.f32.mrf.mxu0
        %v518 = vadd.f32 0.0, %v517
        %v519 = vand.u32 %v289, 4294901760
        %v520 = vsub.f32 %v289, %v519
        %v521 = vand.u32 %v520, 4294901760
        %v522 = vsub.f32 %v520, %v521
        %v523 = vand.u32 %v522, 4294901760
        %524 = vmatmul.f32.gmra.mxu0 %v523
        %v525 = vpop.f32.mrf.mxu0
        %v526 = vadd.f32 0.0, %v525
        %v527 = vand.u32 %v292, 4294901760
        %v528 = vsub.f32 %v292, %v527
        %v529 = vand.u32 %v528, 4294901760
        %v530 = vsub.f32 %v528, %v529
        %v531 = vand.u32 %v530, 4294901760
        %532 = vmatmul.f32.gmra.mxu0 %v531
        %v533 = vpop.f32.mrf.mxu0
        %v534 = vadd.f32 0.0, %v533
        %v535 = vand.u32 %v295, 4294901760
        %v536 = vsub.f32 %v295, %v535
        %v537 = vand.u32 %v536, 4294901760
        %v538 = vsub.f32 %v536, %v537
        %v539 = vand.u32 %v538, 4294901760
        %540 = vmatmul.f32.gmra.mxu0 %v539
        %v541 = vpop.f32.mrf.mxu0
        %v542 = vadd.f32 0.0, %v541
        %v543 = vand.u32 %v298, 4294901760
        %v544 = vsub.f32 %v298, %v543
        %v545 = vand.u32 %v544, 4294901760
        %v546 = vsub.f32 %v544, %v545
        %v547 = vand.u32 %v546, 4294901760
        %548 = vmatmul.f32.gmra.mxu0 %v547
        %v549 = vpop.f32.mrf.mxu0
        %v550 = vadd.f32 0.0, %v549
        %v551 = vand.u32 %v301, 4294901760
        %v552 = vsub.f32 %v301, %v551
        %v553 = vand.u32 %v552, 4294901760
        %v554 = vsub.f32 %v552, %v553
        %v555 = vand.u32 %v554, 4294901760
        %556 = vmatmul.f32.gmra.mxu0 %v555
        %v557 = vpop.f32.mrf.mxu0
        %v558 = vadd.f32 0.0, %v557
        %v559 = vand.u32 %v304, 4294901760
        %v560 = vsub.f32 %v304, %v559
        %v561 = vand.u32 %v560, 4294901760
        %v562 = vsub.f32 %v560, %v561
        %v563 = vand.u32 %v562, 4294901760
        %564 = vmatmul.f32.gmra.mxu0 %v563
        %v565 = vpop.f32.mrf.mxu0
        %v566 = vadd.f32 0.0, %v565
        %v567 = vand.u32 %v307, 4294901760
        %v568 = vsub.f32 %v307, %v567
        %v569 = vand.u32 %v568, 4294901760
        %v570 = vsub.f32 %v568, %v569
        %v571 = vand.u32 %v570, 4294901760
        %572 = vmatmul.f32.gmra.mxu0 %v571
        %v573 = vpop.f32.mrf.mxu0
        %v574 = vadd.f32 0.0, %v573
        %v575 = vand.u32 %v310, 4294901760
        %v576 = vsub.f32 %v310, %v575
        %v577 = vand.u32 %v576, 4294901760
        %v578 = vsub.f32 %v576, %v577
        %v579 = vand.u32 %v578, 4294901760
        %580 = vmatmul.f32.gmra.mxu0 %v579
        %v581 = vpop.f32.mrf.mxu0
        %v582 = vadd.f32 0.0, %v581
        %v583 = vand.u32 %v313, 4294901760
        %v584 = vsub.f32 %v313, %v583
        %v585 = vand.u32 %v584, 4294901760
        %v586 = vsub.f32 %v584, %v585
        %v587 = vand.u32 %v586, 4294901760
        %588 = vmatmul.f32.gmra.mxu0 %v587
        %v589 = vpop.f32.mrf.mxu0
        %v590 = vadd.f32 0.0, %v589
        %v591 = vand.u32 %v316, 4294901760
        %v592 = vsub.f32 %v316, %v591
        %v593 = vand.u32 %v592, 4294901760
        %v594 = vsub.f32 %v592, %v593
        %v595 = vand.u32 %v594, 4294901760
        %596 = vmatmul.f32.gmra.mxu0 %v595
        %v597 = vpop.f32.mrf.mxu0
        %v598 = vadd.f32 0.0, %v597
        %v599 = vand.u32 %v319, 4294901760
        %v600 = vsub.f32 %v319, %v599
        %v601 = vand.u32 %v600, 4294901760
        %v602 = vsub.f32 %v600, %v601
        %v603 = vand.u32 %v602, 4294901760
        %604 = vmatmul.f32.gmra.mxu0 %v603
        %v605 = vpop.f32.mrf.mxu0
        %v606 = vadd.f32 0.0, %v605
        %v607 = vand.u32 %v322, 4294901760
        %v608 = vsub.f32 %v322, %v607
        %v609 = vand.u32 %v608, 4294901760
        %v610 = vsub.f32 %v608, %v609
        %v611 = vand.u32 %v610, 4294901760
        %612 = vmatmul.f32.gmra.mxu0 %v611
        %v613 = vpop.f32.mrf.mxu0
        %v614 = vadd.f32 0.0, %v613
        %v615 = vand.u32 %v325, 4294901760
        %v616 = vsub.f32 %v325, %v615
        %v617 = vand.u32 %v616, 4294901760
        %v618 = vsub.f32 %v616, %v617
        %v619 = vand.u32 %v618, 4294901760
        %620 = vmatmul.f32.gmra.mxu0 %v619
        %v621 = vpop.f32.mrf.mxu0
        %v622 = vadd.f32 0.0, %v621
        %v623 = vand.u32 %v328, 4294901760
        %v624 = vsub.f32 %v328, %v623
        %v625 = vand.u32 %v624, 4294901760
        %v626 = vsub.f32 %v624, %v625
        %v627 = vand.u32 %v626, 4294901760
        %628 = vmatmul.f32.gmra.mxu0 %v627
        %v629 = vpop.f32.mrf.mxu0
        %v630 = vadd.f32 0.0, %v629
        %v631 = vand.u32 %v331, 4294901760
        %v632 = vsub.f32 %v331, %v631
        %v633 = vand.u32 %v632, 4294901760
        %v634 = vsub.f32 %v632, %v633
        %v635 = vand.u32 %v634, 4294901760
        %636 = vmatmul.f32.gmra.mxu0 %v635
        %v637 = vpop.f32.mrf.mxu0
        %v638 = vadd.f32 0.0, %v637
        %v639 = vand.u32 %v334, 4294901760
        %v640 = vsub.f32 %v334, %v639
        %v641 = vand.u32 %v640, 4294901760
        %v642 = vsub.f32 %v640, %v641
        %v643 = vand.u32 %v642, 4294901760
        %644 = vmatmul.f32.gmra.mxu0 %v643
        %v645 = vpop.f32.mrf.mxu0
        %v646 = vadd.f32 0.0, %v645
        %v647 = vand.u32 %v337, 4294901760
        %v648 = vsub.f32 %v337, %v647
        %v649 = vand.u32 %v648, 4294901760
        %v650 = vsub.f32 %v648, %v649
        %v651 = vand.u32 %v650, 4294901760
        %652 = vmatmul.f32.gmra.mxu0 %v651
        %v653 = vpop.f32.mrf.mxu0
        %v654 = vadd.f32 0.0, %v653
        %v655 = vand.u32 %v340, 4294901760
        %v656 = vsub.f32 %v340, %v655
        %v657 = vand.u32 %v656, 4294901760
        %v658 = vsub.f32 %v656, %v657
        %v659 = vand.u32 %v658, 4294901760
        %660 = vmatmul.f32.gmra.mxu0 %v659
        %v661 = vpop.f32.mrf.mxu0
        %v662 = vadd.f32 0.0, %v661
        %v663 = vand.u32 %v343, 4294901760
        %v664 = vsub.f32 %v343, %v663
        %v665 = vand.u32 %v664, 4294901760
        %v666 = vsub.f32 %v664, %v665
        %v667 = vand.u32 %v666, 4294901760
        %668 = vmatmul.f32.gmra.mxu0 %v667
        %v669 = vpop.f32.mrf.mxu0
        %v670 = vadd.f32 0.0, %v669
        %v671 = vand.u32 %v346, 4294901760
        %v672 = vsub.f32 %v346, %v671
        %v673 = vand.u32 %v672, 4294901760
        %v674 = vsub.f32 %v672, %v673
        %v675 = vand.u32 %v674, 4294901760
        %676 = vmatmul.f32.gmra.mxu0 %v675
        %v677 = vpop.f32.mrf.mxu0
        %v678 = vadd.f32 0.0, %v677
        %v679 = vand.u32 %v349, 4294901760
        %v680 = vsub.f32 %v349, %v679
        %v681 = vand.u32 %v680, 4294901760
        %v682 = vsub.f32 %v680, %v681
        %v683 = vand.u32 %v682, 4294901760
        %684 = vmatmul.f32.gmra.mxu0 %v683
        %v685 = vpop.f32.mrf.mxu0
        %v686 = vadd.f32 0.0, %v685
        %687 = vdwg.mxu0
        %688 = vmatpush.msra.mxu0 0.0
        %689 = vmatpush.msra.mxu0 0.0
        %690 = vmatpush.msra.mxu0 0.0
        %691 = vmatpush.msra.mxu0 0.0
        %692 = vmatpush.msra.mxu0 0.0
        %693 = vmatpush.msra.mxu0 0.0
        %694 = vmatpush.msra.mxu0 0.0
        %695 = vmatpush.msra.mxu0 0.0
        %696 = vmatpush.msra.mxu0 0.0
        %697 = vmatpush.msra.mxu0 0.0
        %698 = vmatpush.msra.mxu0 0.0
        %699 = vmatpush.msra.mxu0 0.0
        %700 = vmatpush.msra.mxu0 0.0
        %701 = vmatpush.msra.mxu0 0.0
        %702 = vmatpush.msra.mxu0 0.0
        %703 = vmatpush.msra.mxu0 0.0
        %v704 = vand.u32 %v232, 4294901760
        %705 = vmatmul.f32.gmra.mxu0 %v704
        %v706 = vpop.f32.mrf.mxu0
        %v707 = vadd.f32 %v374, %v706
        %v708 = vand.u32 %v235, 4294901760
        %709 = vmatmul.f32.gmra.mxu0 %v708
        %v710 = vpop.f32.mrf.mxu0
        %v711 = vadd.f32 %v382, %v710
        %v712 = vand.u32 %v238, 4294901760
        %713 = vmatmul.f32.gmra.mxu0 %v712
        %v714 = vpop.f32.mrf.mxu0
        %v715 = vadd.f32 %v390, %v714
        %v716 = vand.u32 %v241, 4294901760
        %717 = vmatmul.f32.gmra.mxu0 %v716
        %v718 = vpop.f32.mrf.mxu0
        %v719 = vadd.f32 %v398, %v718
        %v720 = vand.u32 %v244, 4294901760
        %721 = vmatmul.f32.gmra.mxu0 %v720
        %v722 = vpop.f32.mrf.mxu0
        %v723 = vadd.f32 %v406, %v722
        %v724 = vand.u32 %v247, 4294901760
        %725 = vmatmul.f32.gmra.mxu0 %v724
        %v726 = vpop.f32.mrf.mxu0
        %v727 = vadd.f32 %v414, %v726
        %v728 = vand.u32 %v250, 4294901760
        %729 = vmatmul.f32.gmra.mxu0 %v728
        %v730 = vpop.f32.mrf.mxu0
        %v731 = vadd.f32 %v422, %v730
        %v732 = vand.u32 %v253, 4294901760
        %733 = vmatmul.f32.gmra.mxu0 %v732
        %v734 = vpop.f32.mrf.mxu0
        %v735 = vadd.f32 %v430, %v734
        %v736 = vand.u32 %v256, 4294901760
        %737 = vmatmul.f32.gmra.mxu0 %v736
        %v738 = vpop.f32.mrf.mxu0
        %v739 = vadd.f32 %v438, %v738
        %v740 = vand.u32 %v259, 4294901760
        %741 = vmatmul.f32.gmra.mxu0 %v740
        %v742 = vpop.f32.mrf.mxu0
        %v743 = vadd.f32 %v446, %v742
        %v744 = vand.u32 %v262, 4294901760
        %745 = vmatmul.f32.gmra.mxu0 %v744
        %v746 = vpop.f32.mrf.mxu0
        %v747 = vadd.f32 %v454, %v746
        %v748 = vand.u32 %v265, 4294901760
        %749 = vmatmul.f32.gmra.mxu0 %v748
        %v750 = vpop.f32.mrf.mxu0
        %v751 = vadd.f32 %v462, %v750
        %v752 = vand.u32 %v268, 4294901760
        %753 = vmatmul.f32.gmra.mxu0 %v752
        %v754 = vpop.f32.mrf.mxu0
        %v755 = vadd.f32 %v470, %v754
        %v756 = vand.u32 %v271, 4294901760
        %757 = vmatmul.f32.gmra.mxu0 %v756
        %v758 = vpop.f32.mrf.mxu0
        %v759 = vadd.f32 %v478, %v758
        %v760 = vand.u32 %v274, 4294901760
        %761 = vmatmul.f32.gmra.mxu0 %v760
        %v762 = vpop.f32.mrf.mxu0
        %v763 = vadd.f32 %v486, %v762
        %v764 = vand.u32 %v277, 4294901760
        %765 = vmatmul.f32.gmra.mxu0 %v764
        %v766 = vpop.f32.mrf.mxu0
        %v767 = vadd.f32 %v494, %v766
        %v768 = vand.u32 %v280, 4294901760
        %769 = vmatmul.f32.gmra.mxu0 %v768
        %v770 = vpop.f32.mrf.mxu0
        %v771 = vadd.f32 %v502, %v770
        %v772 = vand.u32 %v283, 4294901760
        %773 = vmatmul.f32.gmra.mxu0 %v772
        %v774 = vpop.f32.mrf.mxu0
        %v775 = vadd.f32 %v510, %v774
        %v776 = vand.u32 %v286, 4294901760
        %777 = vmatmul.f32.gmra.mxu0 %v776
        %v778 = vpop.f32.mrf.mxu0
        %v779 = vadd.f32 %v518, %v778
        %v780 = vand.u32 %v289, 4294901760
        %781 = vmatmul.f32.gmra.mxu0 %v780
        %v782 = vpop.f32.mrf.mxu0
        %v783 = vadd.f32 %v526, %v782
        %v784 = vand.u32 %v292, 4294901760
        %785 = vmatmul.f32.gmra.mxu0 %v784
        %v786 = vpop.f32.mrf.mxu0
        %v787 = vadd.f32 %v534, %v786
        %v788 = vand.u32 %v295, 4294901760
        %789 = vmatmul.f32.gmra.mxu0 %v788
        %v790 = vpop.f32.mrf.mxu0
        %v791 = vadd.f32 %v542, %v790
        %v792 = vand.u32 %v298, 4294901760
        %793 = vmatmul.f32.gmra.mxu0 %v792
        %v794 = vpop.f32.mrf.mxu0
        %v795 = vadd.f32 %v550, %v794
        %v796 = vand.u32 %v301, 4294901760
        %797 = vmatmul.f32.gmra.mxu0 %v796
        %v798 = vpop.f32.mrf.mxu0
        %v799 = vadd.f32 %v558, %v798
        %v800 = vand.u32 %v304, 4294901760
        %801 = vmatmul.f32.gmra.mxu0 %v800
        %v802 = vpop.f32.mrf.mxu0
        %v803 = vadd.f32 %v566, %v802
        %v804 = vand.u32 %v307, 4294901760
        %805 = vmatmul.f32.gmra.mxu0 %v804
        %v806 = vpop.f32.mrf.mxu0
        %v807 = vadd.f32 %v574, %v806
        %v808 = vand.u32 %v310, 4294901760
        %809 = vmatmul.f32.gmra.mxu0 %v808
        %v810 = vpop.f32.mrf.mxu0
        %v811 = vadd.f32 %v582, %v810
        %v812 = vand.u32 %v313, 4294901760
        %813 = vmatmul.f32.gmra.mxu0 %v812
        %v814 = vpop.f32.mrf.mxu0
        %v815 = vadd.f32 %v590, %v814
        %v816 = vand.u32 %v316, 4294901760
        %817 = vmatmul.f32.gmra.mxu0 %v816
        %v818 = vpop.f32.mrf.mxu0
        %v819 = vadd.f32 %v598, %v818
        %v820 = vand.u32 %v319, 4294901760
        %821 = vmatmul.f32.gmra.mxu0 %v820
        %v822 = vpop.f32.mrf.mxu0
        %v823 = vadd.f32 %v606, %v822
        %v824 = vand.u32 %v322, 4294901760
        %825 = vmatmul.f32.gmra.mxu0 %v824
        %v826 = vpop.f32.mrf.mxu0
        %v827 = vadd.f32 %v614, %v826
        %v828 = vand.u32 %v325, 4294901760
        %829 = vmatmul.f32.gmra.mxu0 %v828
        %v830 = vpop.f32.mrf.mxu0
        %v831 = vadd.f32 %v622, %v830
        %v832 = vand.u32 %v328, 4294901760
        %833 = vmatmul.f32.gmra.mxu0 %v832
        %v834 = vpop.f32.mrf.mxu0
        %v835 = vadd.f32 %v630, %v834
        %v836 = vand.u32 %v331, 4294901760
        %837 = vmatmul.f32.gmra.mxu0 %v836
        %v838 = vpop.f32.mrf.mxu0
        %v839 = vadd.f32 %v638, %v838
        %v840 = vand.u32 %v334, 4294901760
        %841 = vmatmul.f32.gmra.mxu0 %v840
        %v842 = vpop.f32.mrf.mxu0
        %v843 = vadd.f32 %v646, %v842
        %v844 = vand.u32 %v337, 4294901760
        %845 = vmatmul.f32.gmra.mxu0 %v844
        %v846 = vpop.f32.mrf.mxu0
        %v847 = vadd.f32 %v654, %v846
        %v848 = vand.u32 %v340, 4294901760
        %849 = vmatmul.f32.gmra.mxu0 %v848
        %v850 = vpop.f32.mrf.mxu0
        %v851 = vadd.f32 %v662, %v850
        %v852 = vand.u32 %v343, 4294901760
        %853 = vmatmul.f32.gmra.mxu0 %v852
        %v854 = vpop.f32.mrf.mxu0
        %v855 = vadd.f32 %v670, %v854
        %v856 = vand.u32 %v346, 4294901760
        %857 = vmatmul.f32.gmra.mxu0 %v856
        %v858 = vpop.f32.mrf.mxu0
        %v859 = vadd.f32 %v678, %v858
        %v860 = vand.u32 %v349, 4294901760
        %861 = vmatmul.f32.gmra.mxu0 %v860
        %v862 = vpop.f32.mrf.mxu0
        %v863 = vadd.f32 %v686, %v862
        %864 = vdwg.mxu0
        %865 = vmatpush.msra.mxu0 0.0
        %866 = vmatpush.msra.mxu0 0.0
        %867 = vmatpush.msra.mxu0 0.0
        %868 = vmatpush.msra.mxu0 0.0
        %869 = vmatpush.msra.mxu0 0.0
        %870 = vmatpush.msra.mxu0 0.0
        %871 = vmatpush.msra.mxu0 0.0
        %872 = vmatpush.msra.mxu0 0.0
        %873 = vmatpush.msra.mxu0 0.0
        %874 = vmatpush.msra.mxu0 0.0
        %875 = vmatpush.msra.mxu0 0.0
        %876 = vmatpush.msra.mxu0 0.0
        %877 = vmatpush.msra.mxu0 0.0
        %878 = vmatpush.msra.mxu0 0.0
        %879 = vmatpush.msra.mxu0 0.0
        %880 = vmatpush.msra.mxu0 0.0
        %v881 = vand.u32 %v232, 4294901760
        %v882 = vsub.f32 %v232, %v881
        %883 = vmatmul.f32.gmra.mxu0 %v882
        %v884 = vpop.f32.mrf.mxu0
        %v885 = vadd.f32 %v707, %v884
        %v886 = vand.u32 %v235, 4294901760
        %v887 = vsub.f32 %v235, %v886
        %888 = vmatmul.f32.gmra.mxu0 %v887
        %v889 = vpop.f32.mrf.mxu0
        %v890 = vadd.f32 %v711, %v889
        %v891 = vand.u32 %v238, 4294901760
        %v892 = vsub.f32 %v238, %v891
        %893 = vmatmul.f32.gmra.mxu0 %v892
        %v894 = vpop.f32.mrf.mxu0
        %v895 = vadd.f32 %v715, %v894
        %v896 = vand.u32 %v241, 4294901760
        %v897 = vsub.f32 %v241, %v896
        %898 = vmatmul.f32.gmra.mxu0 %v897
        %v899 = vpop.f32.mrf.mxu0
        %v900 = vadd.f32 %v719, %v899
        %v901 = vand.u32 %v244, 4294901760
        %v902 = vsub.f32 %v244, %v901
        %903 = vmatmul.f32.gmra.mxu0 %v902
        %v904 = vpop.f32.mrf.mxu0
        %v905 = vadd.f32 %v723, %v904
        %v906 = vand.u32 %v247, 4294901760
        %v907 = vsub.f32 %v247, %v906
        %908 = vmatmul.f32.gmra.mxu0 %v907
        %v909 = vpop.f32.mrf.mxu0
        %v910 = vadd.f32 %v727, %v909
        %v911 = vand.u32 %v250, 4294901760
        %v912 = vsub.f32 %v250, %v911
        %913 = vmatmul.f32.gmra.mxu0 %v912
        %v914 = vpop.f32.mrf.mxu0
        %v915 = vadd.f32 %v731, %v914
        %v916 = vand.u32 %v253, 4294901760
        %v917 = vsub.f32 %v253, %v916
        %918 = vmatmul.f32.gmra.mxu0 %v917
        %v919 = vpop.f32.mrf.mxu0
        %v920 = vadd.f32 %v735, %v919
        %v921 = vand.u32 %v256, 4294901760
        %v922 = vsub.f32 %v256, %v921
        %923 = vmatmul.f32.gmra.mxu0 %v922
        %v924 = vpop.f32.mrf.mxu0
        %v925 = vadd.f32 %v739, %v924
        %v926 = vand.u32 %v259, 4294901760
        %v927 = vsub.f32 %v259, %v926
        %928 = vmatmul.f32.gmra.mxu0 %v927
        %v929 = vpop.f32.mrf.mxu0
        %v930 = vadd.f32 %v743, %v929
        %v931 = vand.u32 %v262, 4294901760
        %v932 = vsub.f32 %v262, %v931
        %933 = vmatmul.f32.gmra.mxu0 %v932
        %v934 = vpop.f32.mrf.mxu0
        %v935 = vadd.f32 %v747, %v934
        %v936 = vand.u32 %v265, 4294901760
        %v937 = vsub.f32 %v265, %v936
        %938 = vmatmul.f32.gmra.mxu0 %v937
        %v939 = vpop.f32.mrf.mxu0
        %v940 = vadd.f32 %v751, %v939
        %v941 = vand.u32 %v268, 4294901760
        %v942 = vsub.f32 %v268, %v941
        %943 = vmatmul.f32.gmra.mxu0 %v942
        %v944 = vpop.f32.mrf.mxu0
        %v945 = vadd.f32 %v755, %v944
        %v946 = vand.u32 %v271, 4294901760
        %v947 = vsub.f32 %v271, %v946
        %948 = vmatmul.f32.gmra.mxu0 %v947
        %v949 = vpop.f32.mrf.mxu0
        %v950 = vadd.f32 %v759, %v949
        %v951 = vand.u32 %v274, 4294901760
        %v952 = vsub.f32 %v274, %v951
        %953 = vmatmul.f32.gmra.mxu0 %v952
        %v954 = vpop.f32.mrf.mxu0
        %v955 = vadd.f32 %v763, %v954
        %v956 = vand.u32 %v277, 4294901760
        %v957 = vsub.f32 %v277, %v956
        %958 = vmatmul.f32.gmra.mxu0 %v957
        %v959 = vpop.f32.mrf.mxu0
        %v960 = vadd.f32 %v767, %v959
        %v961 = vand.u32 %v280, 4294901760
        %v962 = vsub.f32 %v280, %v961
        %963 = vmatmul.f32.gmra.mxu0 %v962
        %v964 = vpop.f32.mrf.mxu0
        %v965 = vadd.f32 %v771, %v964
        %v966 = vand.u32 %v283, 4294901760
        %v967 = vsub.f32 %v283, %v966
        %968 = vmatmul.f32.gmra.mxu0 %v967
        %v969 = vpop.f32.mrf.mxu0
        %v970 = vadd.f32 %v775, %v969
        %v971 = vand.u32 %v286, 4294901760
        %v972 = vsub.f32 %v286, %v971
        %973 = vmatmul.f32.gmra.mxu0 %v972
        %v974 = vpop.f32.mrf.mxu0
        %v975 = vadd.f32 %v779, %v974
        %v976 = vand.u32 %v289, 4294901760
        %v977 = vsub.f32 %v289, %v976
        %978 = vmatmul.f32.gmra.mxu0 %v977
        %v979 = vpop.f32.mrf.mxu0
        %v980 = vadd.f32 %v783, %v979
        %v981 = vand.u32 %v292, 4294901760
        %v982 = vsub.f32 %v292, %v981
        %983 = vmatmul.f32.gmra.mxu0 %v982
        %v984 = vpop.f32.mrf.mxu0
        %v985 = vadd.f32 %v787, %v984
        %v986 = vand.u32 %v295, 4294901760
        %v987 = vsub.f32 %v295, %v986
        %988 = vmatmul.f32.gmra.mxu0 %v987
        %v989 = vpop.f32.mrf.mxu0
        %v990 = vadd.f32 %v791, %v989
        %v991 = vand.u32 %v298, 4294901760
        %v992 = vsub.f32 %v298, %v991
        %993 = vmatmul.f32.gmra.mxu0 %v992
        %v994 = vpop.f32.mrf.mxu0
        %v995 = vadd.f32 %v795, %v994
        %v996 = vand.u32 %v301, 4294901760
        %v997 = vsub.f32 %v301, %v996
        %998 = vmatmul.f32.gmra.mxu0 %v997
        %v999 = vpop.f32.mrf.mxu0
        %v1000 = vadd.f32 %v799, %v999
        %v1001 = vand.u32 %v304, 4294901760
        %v1002 = vsub.f32 %v304, %v1001
        %1003 = vmatmul.f32.gmra.mxu0 %v1002
        %v1004 = vpop.f32.mrf.mxu0
        %v1005 = vadd.f32 %v803, %v1004
        %v1006 = vand.u32 %v307, 4294901760
        %v1007 = vsub.f32 %v307, %v1006
        %1008 = vmatmul.f32.gmra.mxu0 %v1007
        %v1009 = vpop.f32.mrf.mxu0
        %v1010 = vadd.f32 %v807, %v1009
        %v1011 = vand.u32 %v310, 4294901760
        %v1012 = vsub.f32 %v310, %v1011
        %1013 = vmatmul.f32.gmra.mxu0 %v1012
        %v1014 = vpop.f32.mrf.mxu0
        %v1015 = vadd.f32 %v811, %v1014
        %v1016 = vand.u32 %v313, 4294901760
        %v1017 = vsub.f32 %v313, %v1016
        %1018 = vmatmul.f32.gmra.mxu0 %v1017
        %v1019 = vpop.f32.mrf.mxu0
        %v1020 = vadd.f32 %v815, %v1019
        %v1021 = vand.u32 %v316, 4294901760
        %v1022 = vsub.f32 %v316, %v1021
        %1023 = vmatmul.f32.gmra.mxu0 %v1022
        %v1024 = vpop.f32.mrf.mxu0
        %v1025 = vadd.f32 %v819, %v1024
        %v1026 = vand.u32 %v319, 4294901760
        %v1027 = vsub.f32 %v319, %v1026
        %1028 = vmatmul.f32.gmra.mxu0 %v1027
        %v1029 = vpop.f32.mrf.mxu0
        %v1030 = vadd.f32 %v823, %v1029
        %v1031 = vand.u32 %v322, 4294901760
        %v1032 = vsub.f32 %v322, %v1031
        %1033 = vmatmul.f32.gmra.mxu0 %v1032
        %v1034 = vpop.f32.mrf.mxu0
        %v1035 = vadd.f32 %v827, %v1034
        %v1036 = vand.u32 %v325, 4294901760
        %v1037 = vsub.f32 %v325, %v1036
        %1038 = vmatmul.f32.gmra.mxu0 %v1037
        %v1039 = vpop.f32.mrf.mxu0
        %v1040 = vadd.f32 %v831, %v1039
        %v1041 = vand.u32 %v328, 4294901760
        %v1042 = vsub.f32 %v328, %v1041
        %1043 = vmatmul.f32.gmra.mxu0 %v1042
        %v1044 = vpop.f32.mrf.mxu0
        %v1045 = vadd.f32 %v835, %v1044
        %v1046 = vand.u32 %v331, 4294901760
        %v1047 = vsub.f32 %v331, %v1046
        %1048 = vmatmul.f32.gmra.mxu0 %v1047
        %v1049 = vpop.f32.mrf.mxu0
        %v1050 = vadd.f32 %v839, %v1049
        %v1051 = vand.u32 %v334, 4294901760
        %v1052 = vsub.f32 %v334, %v1051
        %1053 = vmatmul.f32.gmra.mxu0 %v1052
        %v1054 = vpop.f32.mrf.mxu0
        %v1055 = vadd.f32 %v843, %v1054
        %v1056 = vand.u32 %v337, 4294901760
        %v1057 = vsub.f32 %v337, %v1056
        %1058 = vmatmul.f32.gmra.mxu0 %v1057
        %v1059 = vpop.f32.mrf.mxu0
        %v1060 = vadd.f32 %v847, %v1059
        %v1061 = vand.u32 %v340, 4294901760
        %v1062 = vsub.f32 %v340, %v1061
        %1063 = vmatmul.f32.gmra.mxu0 %v1062
        %v1064 = vpop.f32.mrf.mxu0
        %v1065 = vadd.f32 %v851, %v1064
        %v1066 = vand.u32 %v343, 4294901760
        %v1067 = vsub.f32 %v343, %v1066
        %1068 = vmatmul.f32.gmra.mxu0 %v1067
        %v1069 = vpop.f32.mrf.mxu0
        %v1070 = vadd.f32 %v855, %v1069
        %v1071 = vand.u32 %v346, 4294901760
        %v1072 = vsub.f32 %v346, %v1071
        %1073 = vmatmul.f32.gmra.mxu0 %v1072
        %v1074 = vpop.f32.mrf.mxu0
        %v1075 = vadd.f32 %v859, %v1074
        %v1076 = vand.u32 %v349, 4294901760
        %v1077 = vsub.f32 %v349, %v1076
        %1078 = vmatmul.f32.gmra.mxu0 %v1077
        %v1079 = vpop.f32.mrf.mxu0
        %v1080 = vadd.f32 %v863, %v1079
        %1081 = vdwg.mxu0
        %1082 = vmatpush.msra.mxu0 0.0
        %1083 = vmatpush.msra.mxu0 1.0
        %1084 = vmatpush.msra.mxu0 1.0
        %1085 = vmatpush.msra.mxu0 1.0
        %1086 = vmatpush.msra.mxu0 1.0
        %1087 = vmatpush.msra.mxu0 1.0
        %1088 = vmatpush.msra.mxu0 1.0
        %1089 = vmatpush.msra.mxu0 1.0
        %1090 = vmatpush.msra.mxu0 1.0
        %1091 = vmatpush.msra.mxu0 1.0
        %1092 = vmatpush.msra.mxu0 1.0
        %1093 = vmatpush.msra.mxu0 1.0
        %1094 = vmatpush.msra.mxu0 1.0
        %1095 = vmatpush.msra.mxu0 1.0
        %1096 = vmatpush.msra.mxu0 1.0
        %1097 = vmatpush.msra.mxu0 1.0
        %v1098 = vand.u32 %v232, 4294901760
        %v1099 = vsub.f32 %v232, %v1098
        %v1100 = vand.u32 %v1099, 4294901760
        %1101 = vmatmul.f32.gmra.mxu0 %v1100
        %v1102 = vpop.f32.mrf.mxu0
        %v1103 = vadd.f32 %v885, %v1102
        %v1104 = vand.u32 %v235, 4294901760
        %v1105 = vsub.f32 %v235, %v1104
        %v1106 = vand.u32 %v1105, 4294901760
        %1107 = vmatmul.f32.gmra.mxu0 %v1106
        %v1108 = vpop.f32.mrf.mxu0
        %v1109 = vadd.f32 %v890, %v1108
        %v1110 = vand.u32 %v238, 4294901760
        %v1111 = vsub.f32 %v238, %v1110
        %v1112 = vand.u32 %v1111, 4294901760
        %1113 = vmatmul.f32.gmra.mxu0 %v1112
        %v1114 = vpop.f32.mrf.mxu0
        %v1115 = vadd.f32 %v895, %v1114
        %v1116 = vand.u32 %v241, 4294901760
        %v1117 = vsub.f32 %v241, %v1116
        %v1118 = vand.u32 %v1117, 4294901760
        %1119 = vmatmul.f32.gmra.mxu0 %v1118
        %v1120 = vpop.f32.mrf.mxu0
        %v1121 = vadd.f32 %v900, %v1120
        %v1122 = vand.u32 %v244, 4294901760
        %v1123 = vsub.f32 %v244, %v1122
        %v1124 = vand.u32 %v1123, 4294901760
        %1125 = vmatmul.f32.gmra.mxu0 %v1124
        %v1126 = vpop.f32.mrf.mxu0
        %v1127 = vadd.f32 %v905, %v1126
        %v1128 = vand.u32 %v247, 4294901760
        %v1129 = vsub.f32 %v247, %v1128
        %v1130 = vand.u32 %v1129, 4294901760
        %1131 = vmatmul.f32.gmra.mxu0 %v1130
        %v1132 = vpop.f32.mrf.mxu0
        %v1133 = vadd.f32 %v910, %v1132
        %v1134 = vand.u32 %v250, 4294901760
        %v1135 = vsub.f32 %v250, %v1134
        %v1136 = vand.u32 %v1135, 4294901760
        %1137 = vmatmul.f32.gmra.mxu0 %v1136
        %v1138 = vpop.f32.mrf.mxu0
        %v1139 = vadd.f32 %v915, %v1138
        %v1140 = vand.u32 %v253, 4294901760
        %v1141 = vsub.f32 %v253, %v1140
        %v1142 = vand.u32 %v1141, 4294901760
        %1143 = vmatmul.f32.gmra.mxu0 %v1142
        %v1144 = vpop.f32.mrf.mxu0
        %v1145 = vadd.f32 %v920, %v1144
        %v1146 = vand.u32 %v256, 4294901760
        %v1147 = vsub.f32 %v256, %v1146
        %v1148 = vand.u32 %v1147, 4294901760
        %1149 = vmatmul.f32.gmra.mxu0 %v1148
        %v1150 = vpop.f32.mrf.mxu0
        %v1151 = vadd.f32 %v925, %v1150
        %v1152 = vand.u32 %v259, 4294901760
        %v1153 = vsub.f32 %v259, %v1152
        %v1154 = vand.u32 %v1153, 4294901760
        %1155 = vmatmul.f32.gmra.mxu0 %v1154
        %v1156 = vpop.f32.mrf.mxu0
        %v1157 = vadd.f32 %v930, %v1156
        %v1158 = vand.u32 %v262, 4294901760
        %v1159 = vsub.f32 %v262, %v1158
        %v1160 = vand.u32 %v1159, 4294901760
        %1161 = vmatmul.f32.gmra.mxu0 %v1160
        %v1162 = vpop.f32.mrf.mxu0
        %v1163 = vadd.f32 %v935, %v1162
        %v1164 = vand.u32 %v265, 4294901760
        %v1165 = vsub.f32 %v265, %v1164
        %v1166 = vand.u32 %v1165, 4294901760
        %1167 = vmatmul.f32.gmra.mxu0 %v1166
        %v1168 = vpop.f32.mrf.mxu0
        %v1169 = vadd.f32 %v940, %v1168
        %v1170 = vand.u32 %v268, 4294901760
        %v1171 = vsub.f32 %v268, %v1170
        %v1172 = vand.u32 %v1171, 4294901760
        %1173 = vmatmul.f32.gmra.mxu0 %v1172
        %v1174 = vpop.f32.mrf.mxu0
        %v1175 = vadd.f32 %v945, %v1174
        %v1176 = vand.u32 %v271, 4294901760
        %v1177 = vsub.f32 %v271, %v1176
        %v1178 = vand.u32 %v1177, 4294901760
        %1179 = vmatmul.f32.gmra.mxu0 %v1178
        %v1180 = vpop.f32.mrf.mxu0
        %v1181 = vadd.f32 %v950, %v1180
        %v1182 = vand.u32 %v274, 4294901760
        %v1183 = vsub.f32 %v274, %v1182
        %v1184 = vand.u32 %v1183, 4294901760
        %1185 = vmatmul.f32.gmra.mxu0 %v1184
        %v1186 = vpop.f32.mrf.mxu0
        %v1187 = vadd.f32 %v955, %v1186
        %v1188 = vand.u32 %v277, 4294901760
        %v1189 = vsub.f32 %v277, %v1188
        %v1190 = vand.u32 %v1189, 4294901760
        %1191 = vmatmul.f32.gmra.mxu0 %v1190
        %v1192 = vpop.f32.mrf.mxu0
        %v1193 = vadd.f32 %v960, %v1192
        %v1194 = vand.u32 %v280, 4294901760
        %v1195 = vsub.f32 %v280, %v1194
        %v1196 = vand.u32 %v1195, 4294901760
        %1197 = vmatmul.f32.gmra.mxu0 %v1196
        %v1198 = vpop.f32.mrf.mxu0
        %v1199 = vadd.f32 %v965, %v1198
        %v1200 = vand.u32 %v283, 4294901760
        %v1201 = vsub.f32 %v283, %v1200
        %v1202 = vand.u32 %v1201, 4294901760
        %1203 = vmatmul.f32.gmra.mxu0 %v1202
        %v1204 = vpop.f32.mrf.mxu0
        %v1205 = vadd.f32 %v970, %v1204
        %v1206 = vand.u32 %v286, 4294901760
        %v1207 = vsub.f32 %v286, %v1206
        %v1208 = vand.u32 %v1207, 4294901760
        %1209 = vmatmul.f32.gmra.mxu0 %v1208
        %v1210 = vpop.f32.mrf.mxu0
        %v1211 = vadd.f32 %v975, %v1210
        %v1212 = vand.u32 %v289, 4294901760
        %v1213 = vsub.f32 %v289, %v1212
        %v1214 = vand.u32 %v1213, 4294901760
        %1215 = vmatmul.f32.gmra.mxu0 %v1214
        %v1216 = vpop.f32.mrf.mxu0
        %v1217 = vadd.f32 %v980, %v1216
        %v1218 = vand.u32 %v292, 4294901760
        %v1219 = vsub.f32 %v292, %v1218
        %v1220 = vand.u32 %v1219, 4294901760
        %1221 = vmatmul.f32.gmra.mxu0 %v1220
        %v1222 = vpop.f32.mrf.mxu0
        %v1223 = vadd.f32 %v985, %v1222
        %v1224 = vand.u32 %v295, 4294901760
        %v1225 = vsub.f32 %v295, %v1224
        %v1226 = vand.u32 %v1225, 4294901760
        %1227 = vmatmul.f32.gmra.mxu0 %v1226
        %v1228 = vpop.f32.mrf.mxu0
        %v1229 = vadd.f32 %v990, %v1228
        %v1230 = vand.u32 %v298, 4294901760
        %v1231 = vsub.f32 %v298, %v1230
        %v1232 = vand.u32 %v1231, 4294901760
        %1233 = vmatmul.f32.gmra.mxu0 %v1232
        %v1234 = vpop.f32.mrf.mxu0
        %v1235 = vadd.f32 %v995, %v1234
        %v1236 = vand.u32 %v301, 4294901760
        %v1237 = vsub.f32 %v301, %v1236
        %v1238 = vand.u32 %v1237, 4294901760
        %1239 = vmatmul.f32.gmra.mxu0 %v1238
        %v1240 = vpop.f32.mrf.mxu0
        %v1241 = vadd.f32 %v1000, %v1240
        %v1242 = vand.u32 %v304, 4294901760
        %v1243 = vsub.f32 %v304, %v1242
        %v1244 = vand.u32 %v1243, 4294901760
        %1245 = vmatmul.f32.gmra.mxu0 %v1244
        %v1246 = vpop.f32.mrf.mxu0
        %v1247 = vadd.f32 %v1005, %v1246
        %v1248 = vand.u32 %v307, 4294901760
        %v1249 = vsub.f32 %v307, %v1248
        %v1250 = vand.u32 %v1249, 4294901760
        %1251 = vmatmul.f32.gmra.mxu0 %v1250
        %v1252 = vpop.f32.mrf.mxu0
        %v1253 = vadd.f32 %v1010, %v1252
        %v1254 = vand.u32 %v310, 4294901760
        %v1255 = vsub.f32 %v310, %v1254
        %v1256 = vand.u32 %v1255, 4294901760
        %1257 = vmatmul.f32.gmra.mxu0 %v1256
        %v1258 = vpop.f32.mrf.mxu0
        %v1259 = vadd.f32 %v1015, %v1258
        %v1260 = vand.u32 %v313, 4294901760
        %v1261 = vsub.f32 %v313, %v1260
        %v1262 = vand.u32 %v1261, 4294901760
        %1263 = vmatmul.f32.gmra.mxu0 %v1262
        %v1264 = vpop.f32.mrf.mxu0
        %v1265 = vadd.f32 %v1020, %v1264
        %v1266 = vand.u32 %v316, 4294901760
        %v1267 = vsub.f32 %v316, %v1266
        %v1268 = vand.u32 %v1267, 4294901760
        %1269 = vmatmul.f32.gmra.mxu0 %v1268
        %v1270 = vpop.f32.mrf.mxu0
        %v1271 = vadd.f32 %v1025, %v1270
        %v1272 = vand.u32 %v319, 4294901760
        %v1273 = vsub.f32 %v319, %v1272
        %v1274 = vand.u32 %v1273, 4294901760
        %1275 = vmatmul.f32.gmra.mxu0 %v1274
        %v1276 = vpop.f32.mrf.mxu0
        %v1277 = vadd.f32 %v1030, %v1276
        %v1278 = vand.u32 %v322, 4294901760
        %v1279 = vsub.f32 %v322, %v1278
        %v1280 = vand.u32 %v1279, 4294901760
        %1281 = vmatmul.f32.gmra.mxu0 %v1280
        %v1282 = vpop.f32.mrf.mxu0
        %v1283 = vadd.f32 %v1035, %v1282
        %v1284 = vand.u32 %v325, 4294901760
        %v1285 = vsub.f32 %v325, %v1284
        %v1286 = vand.u32 %v1285, 4294901760
        %1287 = vmatmul.f32.gmra.mxu0 %v1286
        %v1288 = vpop.f32.mrf.mxu0
        %v1289 = vadd.f32 %v1040, %v1288
        %v1290 = vand.u32 %v328, 4294901760
        %v1291 = vsub.f32 %v328, %v1290
        %v1292 = vand.u32 %v1291, 4294901760
        %1293 = vmatmul.f32.gmra.mxu0 %v1292
        %v1294 = vpop.f32.mrf.mxu0
        %v1295 = vadd.f32 %v1045, %v1294
        %v1296 = vand.u32 %v331, 4294901760
        %v1297 = vsub.f32 %v331, %v1296
        %v1298 = vand.u32 %v1297, 4294901760
        %1299 = vmatmul.f32.gmra.mxu0 %v1298
        %v1300 = vpop.f32.mrf.mxu0
        %v1301 = vadd.f32 %v1050, %v1300
        %v1302 = vand.u32 %v334, 4294901760
        %v1303 = vsub.f32 %v334, %v1302
        %v1304 = vand.u32 %v1303, 4294901760
        %1305 = vmatmul.f32.gmra.mxu0 %v1304
        %v1306 = vpop.f32.mrf.mxu0
        %v1307 = vadd.f32 %v1055, %v1306
        %v1308 = vand.u32 %v337, 4294901760
        %v1309 = vsub.f32 %v337, %v1308
        %v1310 = vand.u32 %v1309, 4294901760
        %1311 = vmatmul.f32.gmra.mxu0 %v1310
        %v1312 = vpop.f32.mrf.mxu0
        %v1313 = vadd.f32 %v1060, %v1312
        %v1314 = vand.u32 %v340, 4294901760
        %v1315 = vsub.f32 %v340, %v1314
        %v1316 = vand.u32 %v1315, 4294901760
        %1317 = vmatmul.f32.gmra.mxu0 %v1316
        %v1318 = vpop.f32.mrf.mxu0
        %v1319 = vadd.f32 %v1065, %v1318
        %v1320 = vand.u32 %v343, 4294901760
        %v1321 = vsub.f32 %v343, %v1320
        %v1322 = vand.u32 %v1321, 4294901760
        %1323 = vmatmul.f32.gmra.mxu0 %v1322
        %v1324 = vpop.f32.mrf.mxu0
        %v1325 = vadd.f32 %v1070, %v1324
        %v1326 = vand.u32 %v346, 4294901760
        %v1327 = vsub.f32 %v346, %v1326
        %v1328 = vand.u32 %v1327, 4294901760
        %1329 = vmatmul.f32.gmra.mxu0 %v1328
        %v1330 = vpop.f32.mrf.mxu0
        %v1331 = vadd.f32 %v1075, %v1330
        %v1332 = vand.u32 %v349, 4294901760
        %v1333 = vsub.f32 %v349, %v1332
        %v1334 = vand.u32 %v1333, 4294901760
        %1335 = vmatmul.f32.gmra.mxu0 %v1334
        %v1336 = vpop.f32.mrf.mxu0
        %v1337 = vadd.f32 %v1080, %v1336
        %1338 = vdwg.mxu0
        %1339 = vmatpush.msra.mxu0 0.0
        %1340 = vmatpush.msra.mxu0 0.0
        %1341 = vmatpush.msra.mxu0 0.0
        %1342 = vmatpush.msra.mxu0 0.0
        %1343 = vmatpush.msra.mxu0 0.0
        %1344 = vmatpush.msra.mxu0 0.0
        %1345 = vmatpush.msra.mxu0 0.0
        %1346 = vmatpush.msra.mxu0 0.0
        %1347 = vmatpush.msra.mxu0 0.0
        %1348 = vmatpush.msra.mxu0 0.0
        %1349 = vmatpush.msra.mxu0 0.0
        %1350 = vmatpush.msra.mxu0 0.0
        %1351 = vmatpush.msra.mxu0 0.0
        %1352 = vmatpush.msra.mxu0 0.0
        %1353 = vmatpush.msra.mxu0 0.0
        %1354 = vmatpush.msra.mxu0 0.0
        %v1355 = vand.u32 %v232, 4294901760
        %1356 = vmatmul.f32.gmra.mxu0 %v1355
        %v1357 = vpop.f32.mrf.mxu0
        %v1358 = vadd.f32 %v1103, %v1357
        %v1359 = vand.u32 %v235, 4294901760
        %1360 = vmatmul.f32.gmra.mxu0 %v1359
        %v1361 = vpop.f32.mrf.mxu0
        %v1362 = vadd.f32 %v1109, %v1361
        %v1363 = vand.u32 %v238, 4294901760
        %1364 = vmatmul.f32.gmra.mxu0 %v1363
        %v1365 = vpop.f32.mrf.mxu0
        %v1366 = vadd.f32 %v1115, %v1365
        %v1367 = vand.u32 %v241, 4294901760
        %1368 = vmatmul.f32.gmra.mxu0 %v1367
        %v1369 = vpop.f32.mrf.mxu0
        %v1370 = vadd.f32 %v1121, %v1369
        %v1371 = vand.u32 %v244, 4294901760
        %1372 = vmatmul.f32.gmra.mxu0 %v1371
        %v1373 = vpop.f32.mrf.mxu0
        %v1374 = vadd.f32 %v1127, %v1373
        %v1375 = vand.u32 %v247, 4294901760
        %1376 = vmatmul.f32.gmra.mxu0 %v1375
        %v1377 = vpop.f32.mrf.mxu0
        %v1378 = vadd.f32 %v1133, %v1377
        %v1379 = vand.u32 %v250, 4294901760
        %1380 = vmatmul.f32.gmra.mxu0 %v1379
        %v1381 = vpop.f32.mrf.mxu0
        %v1382 = vadd.f32 %v1139, %v1381
        %v1383 = vand.u32 %v253, 4294901760
        %1384 = vmatmul.f32.gmra.mxu0 %v1383
        %v1385 = vpop.f32.mrf.mxu0
        %v1386 = vadd.f32 %v1145, %v1385
        %v1387 = vand.u32 %v256, 4294901760
        %1388 = vmatmul.f32.gmra.mxu0 %v1387
        %v1389 = vpop.f32.mrf.mxu0
        %v1390 = vadd.f32 %v1151, %v1389
        %v1391 = vand.u32 %v259, 4294901760
        %1392 = vmatmul.f32.gmra.mxu0 %v1391
        %v1393 = vpop.f32.mrf.mxu0
        %v1394 = vadd.f32 %v1157, %v1393
        %v1395 = vand.u32 %v262, 4294901760
        %1396 = vmatmul.f32.gmra.mxu0 %v1395
        %v1397 = vpop.f32.mrf.mxu0
        %v1398 = vadd.f32 %v1163, %v1397
        %v1399 = vand.u32 %v265, 4294901760
        %1400 = vmatmul.f32.gmra.mxu0 %v1399
        %v1401 = vpop.f32.mrf.mxu0
        %v1402 = vadd.f32 %v1169, %v1401
        %v1403 = vand.u32 %v268, 4294901760
        %1404 = vmatmul.f32.gmra.mxu0 %v1403
        %v1405 = vpop.f32.mrf.mxu0
        %v1406 = vadd.f32 %v1175, %v1405
        %v1407 = vand.u32 %v271, 4294901760
        %1408 = vmatmul.f32.gmra.mxu0 %v1407
        %v1409 = vpop.f32.mrf.mxu0
        %v1410 = vadd.f32 %v1181, %v1409
        %v1411 = vand.u32 %v274, 4294901760
        %1412 = vmatmul.f32.gmra.mxu0 %v1411
        %v1413 = vpop.f32.mrf.mxu0
        %v1414 = vadd.f32 %v1187, %v1413
        %v1415 = vand.u32 %v277, 4294901760
        %1416 = vmatmul.f32.gmra.mxu0 %v1415
        %v1417 = vpop.f32.mrf.mxu0
        %v1418 = vadd.f32 %v1193, %v1417
        %v1419 = vand.u32 %v280, 4294901760
        %1420 = vmatmul.f32.gmra.mxu0 %v1419
        %v1421 = vpop.f32.mrf.mxu0
        %v1422 = vadd.f32 %v1199, %v1421
        %v1423 = vand.u32 %v283, 4294901760
        %1424 = vmatmul.f32.gmra.mxu0 %v1423
        %v1425 = vpop.f32.mrf.mxu0
        %v1426 = vadd.f32 %v1205, %v1425
        %v1427 = vand.u32 %v286, 4294901760
        %1428 = vmatmul.f32.gmra.mxu0 %v1427
        %v1429 = vpop.f32.mrf.mxu0
        %v1430 = vadd.f32 %v1211, %v1429
        %v1431 = vand.u32 %v289, 4294901760
        %1432 = vmatmul.f32.gmra.mxu0 %v1431
        %v1433 = vpop.f32.mrf.mxu0
        %v1434 = vadd.f32 %v1217, %v1433
        %v1435 = vand.u32 %v292, 4294901760
        %1436 = vmatmul.f32.gmra.mxu0 %v1435
        %v1437 = vpop.f32.mrf.mxu0
        %v1438 = vadd.f32 %v1223, %v1437
        %v1439 = vand.u32 %v295, 4294901760
        %1440 = vmatmul.f32.gmra.mxu0 %v1439
        %v1441 = vpop.f32.mrf.mxu0
        %v1442 = vadd.f32 %v1229, %v1441
        %v1443 = vand.u32 %v298, 4294901760
        %1444 = vmatmul.f32.gmra.mxu0 %v1443
        %v1445 = vpop.f32.mrf.mxu0
        %v1446 = vadd.f32 %v1235, %v1445
        %v1447 = vand.u32 %v301, 4294901760
        %1448 = vmatmul.f32.gmra.mxu0 %v1447
        %v1449 = vpop.f32.mrf.mxu0
        %v1450 = vadd.f32 %v1241, %v1449
        %v1451 = vand.u32 %v304, 4294901760
        %1452 = vmatmul.f32.gmra.mxu0 %v1451
        %v1453 = vpop.f32.mrf.mxu0
        %v1454 = vadd.f32 %v1247, %v1453
        %v1455 = vand.u32 %v307, 4294901760
        %1456 = vmatmul.f32.gmra.mxu0 %v1455
        %v1457 = vpop.f32.mrf.mxu0
        %v1458 = vadd.f32 %v1253, %v1457
        %v1459 = vand.u32 %v310, 4294901760
        %1460 = vmatmul.f32.gmra.mxu0 %v1459
        %v1461 = vpop.f32.mrf.mxu0
        %v1462 = vadd.f32 %v1259, %v1461
        %v1463 = vand.u32 %v313, 4294901760
        %1464 = vmatmul.f32.gmra.mxu0 %v1463
        %v1465 = vpop.f32.mrf.mxu0
        %v1466 = vadd.f32 %v1265, %v1465
        %v1467 = vand.u32 %v316, 4294901760
        %1468 = vmatmul.f32.gmra.mxu0 %v1467
        %v1469 = vpop.f32.mrf.mxu0
        %v1470 = vadd.f32 %v1271, %v1469
        %v1471 = vand.u32 %v319, 4294901760
        %1472 = vmatmul.f32.gmra.mxu0 %v1471
        %v1473 = vpop.f32.mrf.mxu0
        %v1474 = vadd.f32 %v1277, %v1473
        %v1475 = vand.u32 %v322, 4294901760
        %1476 = vmatmul.f32.gmra.mxu0 %v1475
        %v1477 = vpop.f32.mrf.mxu0
        %v1478 = vadd.f32 %v1283, %v1477
        %v1479 = vand.u32 %v325, 4294901760
        %1480 = vmatmul.f32.gmra.mxu0 %v1479
        %v1481 = vpop.f32.mrf.mxu0
        %v1482 = vadd.f32 %v1289, %v1481
        %v1483 = vand.u32 %v328, 4294901760
        %1484 = vmatmul.f32.gmra.mxu0 %v1483
        %v1485 = vpop.f32.mrf.mxu0
        %v1486 = vadd.f32 %v1295, %v1485
        %v1487 = vand.u32 %v331, 4294901760
        %1488 = vmatmul.f32.gmra.mxu0 %v1487
        %v1489 = vpop.f32.mrf.mxu0
        %v1490 = vadd.f32 %v1301, %v1489
        %v1491 = vand.u32 %v334, 4294901760
        %1492 = vmatmul.f32.gmra.mxu0 %v1491
        %v1493 = vpop.f32.mrf.mxu0
        %v1494 = vadd.f32 %v1307, %v1493
        %v1495 = vand.u32 %v337, 4294901760
        %1496 = vmatmul.f32.gmra.mxu0 %v1495
        %v1497 = vpop.f32.mrf.mxu0
        %v1498 = vadd.f32 %v1313, %v1497
        %v1499 = vand.u32 %v340, 4294901760
        %1500 = vmatmul.f32.gmra.mxu0 %v1499
        %v1501 = vpop.f32.mrf.mxu0
        %v1502 = vadd.f32 %v1319, %v1501
        %v1503 = vand.u32 %v343, 4294901760
        %1504 = vmatmul.f32.gmra.mxu0 %v1503
        %v1505 = vpop.f32.mrf.mxu0
        %v1506 = vadd.f32 %v1325, %v1505
        %v1507 = vand.u32 %v346, 4294901760
        %1508 = vmatmul.f32.gmra.mxu0 %v1507
        %v1509 = vpop.f32.mrf.mxu0
        %v1510 = vadd.f32 %v1331, %v1509
        %v1511 = vand.u32 %v349, 4294901760
        %1512 = vmatmul.f32.gmra.mxu0 %v1511
        %v1513 = vpop.f32.mrf.mxu0
        %v1514 = vadd.f32 %v1337, %v1513
        %1515 = vdwg.mxu0
        %1516 = vmatpush.msra.mxu0 0.0
        %1517 = vmatpush.msra.mxu0 1.0
        %1518 = vmatpush.msra.mxu0 1.0
        %1519 = vmatpush.msra.mxu0 1.0
        %1520 = vmatpush.msra.mxu0 1.0
        %1521 = vmatpush.msra.mxu0 1.0
        %1522 = vmatpush.msra.mxu0 1.0
        %1523 = vmatpush.msra.mxu0 1.0
        %1524 = vmatpush.msra.mxu0 1.0
        %1525 = vmatpush.msra.mxu0 1.0
        %1526 = vmatpush.msra.mxu0 1.0
        %1527 = vmatpush.msra.mxu0 1.0
        %1528 = vmatpush.msra.mxu0 1.0
        %1529 = vmatpush.msra.mxu0 1.0
        %1530 = vmatpush.msra.mxu0 1.0
        %1531 = vmatpush.msra.mxu0 1.0
        %v1532 = vand.u32 %v232, 4294901760
        %1533 = vmatmul.f32.gmra.mxu0 %v1532
        %v1534 = vpop.f32.mrf.mxu0
        %v1535 = vadd.f32 %v1358, %v1534
        %v1536 = vand.u32 %v235, 4294901760
        %1537 = vmatmul.f32.gmra.mxu0 %v1536
        %v1538 = vpop.f32.mrf.mxu0
        %v1539 = vadd.f32 %v1362, %v1538
        %v1540 = vand.u32 %v238, 4294901760
        %1541 = vmatmul.f32.gmra.mxu0 %v1540
        %v1542 = vpop.f32.mrf.mxu0
        %v1543 = vadd.f32 %v1366, %v1542
        %v1544 = vand.u32 %v241, 4294901760
        %1545 = vmatmul.f32.gmra.mxu0 %v1544
        %v1546 = vpop.f32.mrf.mxu0
        %v1547 = vadd.f32 %v1370, %v1546
        %v1548 = vand.u32 %v244, 4294901760
        %1549 = vmatmul.f32.gmra.mxu0 %v1548
        %v1550 = vpop.f32.mrf.mxu0
        %v1551 = vadd.f32 %v1374, %v1550
        %v1552 = vand.u32 %v247, 4294901760
        %1553 = vmatmul.f32.gmra.mxu0 %v1552
        %v1554 = vpop.f32.mrf.mxu0
        %v1555 = vadd.f32 %v1378, %v1554
        %v1556 = vand.u32 %v250, 4294901760
        %1557 = vmatmul.f32.gmra.mxu0 %v1556
        %v1558 = vpop.f32.mrf.mxu0
        %v1559 = vadd.f32 %v1382, %v1558
        %v1560 = vand.u32 %v253, 4294901760
        %1561 = vmatmul.f32.gmra.mxu0 %v1560
        %v1562 = vpop.f32.mrf.mxu0
        %v1563 = vadd.f32 %v1386, %v1562
        %v1564 = vand.u32 %v256, 4294901760
        %1565 = vmatmul.f32.gmra.mxu0 %v1564
        %v1566 = vpop.f32.mrf.mxu0
        %v1567 = vadd.f32 %v1390, %v1566
        %v1568 = vand.u32 %v259, 4294901760
        %1569 = vmatmul.f32.gmra.mxu0 %v1568
        %v1570 = vpop.f32.mrf.mxu0
        %v1571 = vadd.f32 %v1394, %v1570
        %v1572 = vand.u32 %v262, 4294901760
        %1573 = vmatmul.f32.gmra.mxu0 %v1572
        %v1574 = vpop.f32.mrf.mxu0
        %v1575 = vadd.f32 %v1398, %v1574
        %v1576 = vand.u32 %v265, 4294901760
        %1577 = vmatmul.f32.gmra.mxu0 %v1576
        %v1578 = vpop.f32.mrf.mxu0
        %v1579 = vadd.f32 %v1402, %v1578
        %v1580 = vand.u32 %v268, 4294901760
        %1581 = vmatmul.f32.gmra.mxu0 %v1580
        %v1582 = vpop.f32.mrf.mxu0
        %v1583 = vadd.f32 %v1406, %v1582
        %v1584 = vand.u32 %v271, 4294901760
        %1585 = vmatmul.f32.gmra.mxu0 %v1584
        %v1586 = vpop.f32.mrf.mxu0
        %v1587 = vadd.f32 %v1410, %v1586
        %v1588 = vand.u32 %v274, 4294901760
        %1589 = vmatmul.f32.gmra.mxu0 %v1588
        %v1590 = vpop.f32.mrf.mxu0
        %v1591 = vadd.f32 %v1414, %v1590
        %v1592 = vand.u32 %v277, 4294901760
        %1593 = vmatmul.f32.gmra.mxu0 %v1592
        %v1594 = vpop.f32.mrf.mxu0
        %v1595 = vadd.f32 %v1418, %v1594
        %v1596 = vand.u32 %v280, 4294901760
        %1597 = vmatmul.f32.gmra.mxu0 %v1596
        %v1598 = vpop.f32.mrf.mxu0
        %v1599 = vadd.f32 %v1422, %v1598
        %v1600 = vand.u32 %v283, 4294901760
        %1601 = vmatmul.f32.gmra.mxu0 %v1600
        %v1602 = vpop.f32.mrf.mxu0
        %v1603 = vadd.f32 %v1426, %v1602
        %v1604 = vand.u32 %v286, 4294901760
        %1605 = vmatmul.f32.gmra.mxu0 %v1604
        %v1606 = vpop.f32.mrf.mxu0
        %v1607 = vadd.f32 %v1430, %v1606
        %v1608 = vand.u32 %v289, 4294901760
        %1609 = vmatmul.f32.gmra.mxu0 %v1608
        %v1610 = vpop.f32.mrf.mxu0
        %v1611 = vadd.f32 %v1434, %v1610
        %v1612 = vand.u32 %v292, 4294901760
        %1613 = vmatmul.f32.gmra.mxu0 %v1612
        %v1614 = vpop.f32.mrf.mxu0
        %v1615 = vadd.f32 %v1438, %v1614
        %v1616 = vand.u32 %v295, 4294901760
        %1617 = vmatmul.f32.gmra.mxu0 %v1616
        %v1618 = vpop.f32.mrf.mxu0
        %v1619 = vadd.f32 %v1442, %v1618
        %v1620 = vand.u32 %v298, 4294901760
        %1621 = vmatmul.f32.gmra.mxu0 %v1620
        %v1622 = vpop.f32.mrf.mxu0
        %v1623 = vadd.f32 %v1446, %v1622
        %v1624 = vand.u32 %v301, 4294901760
        %1625 = vmatmul.f32.gmra.mxu0 %v1624
        %v1626 = vpop.f32.mrf.mxu0
        %v1627 = vadd.f32 %v1450, %v1626
        %v1628 = vand.u32 %v304, 4294901760
        %1629 = vmatmul.f32.gmra.mxu0 %v1628
        %v1630 = vpop.f32.mrf.mxu0
        %v1631 = vadd.f32 %v1454, %v1630
        %v1632 = vand.u32 %v307, 4294901760
        %1633 = vmatmul.f32.gmra.mxu0 %v1632
        %v1634 = vpop.f32.mrf.mxu0
        %v1635 = vadd.f32 %v1458, %v1634
        %v1636 = vand.u32 %v310, 4294901760
        %1637 = vmatmul.f32.gmra.mxu0 %v1636
        %v1638 = vpop.f32.mrf.mxu0
        %v1639 = vadd.f32 %v1462, %v1638
        %v1640 = vand.u32 %v313, 4294901760
        %1641 = vmatmul.f32.gmra.mxu0 %v1640
        %v1642 = vpop.f32.mrf.mxu0
        %v1643 = vadd.f32 %v1466, %v1642
        %v1644 = vand.u32 %v316, 4294901760
        %1645 = vmatmul.f32.gmra.mxu0 %v1644
        %v1646 = vpop.f32.mrf.mxu0
        %v1647 = vadd.f32 %v1470, %v1646
        %v1648 = vand.u32 %v319, 4294901760
        %1649 = vmatmul.f32.gmra.mxu0 %v1648
        %v1650 = vpop.f32.mrf.mxu0
        %v1651 = vadd.f32 %v1474, %v1650
        %v1652 = vand.u32 %v322, 4294901760
        %1653 = vmatmul.f32.gmra.mxu0 %v1652
        %v1654 = vpop.f32.mrf.mxu0
        %v1655 = vadd.f32 %v1478, %v1654
        %v1656 = vand.u32 %v325, 4294901760
        %1657 = vmatmul.f32.gmra.mxu0 %v1656
        %v1658 = vpop.f32.mrf.mxu0
        %v1659 = vadd.f32 %v1482, %v1658
        %v1660 = vand.u32 %v328, 4294901760
        %1661 = vmatmul.f32.gmra.mxu0 %v1660
        %v1662 = vpop.f32.mrf.mxu0
        %v1663 = vadd.f32 %v1486, %v1662
        %v1664 = vand.u32 %v331, 4294901760
        %1665 = vmatmul.f32.gmra.mxu0 %v1664
        %v1666 = vpop.f32.mrf.mxu0
        %v1667 = vadd.f32 %v1490, %v1666
        %v1668 = vand.u32 %v334, 4294901760
        %1669 = vmatmul.f32.gmra.mxu0 %v1668
        %v1670 = vpop.f32.mrf.mxu0
        %v1671 = vadd.f32 %v1494, %v1670
        %v1672 = vand.u32 %v337, 4294901760
        %1673 = vmatmul.f32.gmra.mxu0 %v1672
        %v1674 = vpop.f32.mrf.mxu0
        %v1675 = vadd.f32 %v1498, %v1674
        %v1676 = vand.u32 %v340, 4294901760
        %1677 = vmatmul.f32.gmra.mxu0 %v1676
        %v1678 = vpop.f32.mrf.mxu0
        %v1679 = vadd.f32 %v1502, %v1678
        %v1680 = vand.u32 %v343, 4294901760
        %1681 = vmatmul.f32.gmra.mxu0 %v1680
        %v1682 = vpop.f32.mrf.mxu0
        %v1683 = vadd.f32 %v1506, %v1682
        %v1684 = vand.u32 %v346, 4294901760
        %1685 = vmatmul.f32.gmra.mxu0 %v1684
        %v1686 = vpop.f32.mrf.mxu0
        %v1687 = vadd.f32 %v1510, %v1686
        %v1688 = vand.u32 %v349, 4294901760
        %1689 = vmatmul.f32.gmra.mxu0 %v1688
        %v1690 = vpop.f32.mrf.mxu0
        %v1691 = vadd.f32 %v1514, %v1690
        %1692 = vdwg.mxu0
        %v1693 = vmul.f32 %v1535, 0.008333334
        %v1694 = vmul.f32 %v1539, 0.008333334
        %v1695 = vmul.f32 %v1543, 0.008333334
        %v1696 = vmul.f32 %v1547, 0.008333334
        %v1697 = vmul.f32 %v1551, 0.008333334
        %v1698 = vmul.f32 %v1555, 0.008333334
        %v1699 = vmul.f32 %v1559, 0.008333334
        %v1700 = vmul.f32 %v1563, 0.008333334
        %v1701 = vmul.f32 %v1567, 0.008333334
        %v1702 = vmul.f32 %v1571, 0.008333334
        %v1703 = vmul.f32 %v1575, 0.008333334
        %v1704 = vmul.f32 %v1579, 0.008333334
        %v1705 = vmul.f32 %v1583, 0.008333334
        %v1706 = vmul.f32 %v1587, 0.008333334
        %v1707 = vmul.f32 %v1591, 0.008333334
        %v1708 = vmul.f32 %v1595, 0.008333334
        %v1709 = vmul.f32 %v1599, 0.008333334
        %v1710 = vmul.f32 %v1603, 0.008333334
        %v1711 = vmul.f32 %v1607, 0.008333334
        %v1712 = vmul.f32 %v1611, 0.008333334
        %v1713 = vmul.f32 %v1615, 0.008333334
        %v1714 = vmul.f32 %v1619, 0.008333334
        %v1715 = vmul.f32 %v1623, 0.008333334
        %v1716 = vmul.f32 %v1627, 0.008333334
        %v1717 = vmul.f32 %v1631, 0.008333334
        %v1718 = vmul.f32 %v1635, 0.008333334
        %v1719 = vmul.f32 %v1639, 0.008333334
        %v1720 = vmul.f32 %v1643, 0.008333334
        %v1721 = vmul.f32 %v1647, 0.008333334
        %v1722 = vmul.f32 %v1651, 0.008333334
        %v1723 = vmul.f32 %v1655, 0.008333334
        %v1724 = vmul.f32 %v1659, 0.008333334
        %v1725 = vmul.f32 %v1663, 0.008333334
        %v1726 = vmul.f32 %v1667, 0.008333334
        %v1727 = vmul.f32 %v1671, 0.008333334
        %v1728 = vmul.f32 %v1675, 0.008333334
        %v1729 = vmul.f32 %v1679, 0.008333334
        %v1730 = vmul.f32 %v1683, 0.008333334
        %v1731 = vmul.f32 %v1687, 0.008333334
        %v1732 = vmul.f32 %v1691, 0.008333334
        %vm1733 = vcmask 7168
        %1734 = vst.msk [vmem:[%s139] sm:$0xff] %vm1733, %v1693
        %1735 = vst.msk [vmem:[%s139 + $0x8] sm:$0xff] %vm1733, %v1694
        %1736 = vst.msk [vmem:[%s139 + $0x10] sm:$0xff] %vm1733, %v1695
        %1737 = vst.msk [vmem:[%s139 + $0x18] sm:$0xff] %vm1733, %v1696
        %1738 = vst.msk [vmem:[%s139 + $0x20] sm:$0xff] %vm1733, %v1697
        %1739 = vst.msk [vmem:[%s139 + $0x28] sm:$0xff] %vm1733, %v1698
        %1740 = vst.msk [vmem:[%s139 + $0x30] sm:$0xff] %vm1733, %v1699
        %1741 = vst.msk [vmem:[%s139 + $0x38] sm:$0xff] %vm1733, %v1700
        %1742 = vst.msk [vmem:[%s139 + $0x40] sm:$0xff] %vm1733, %v1701
        %1743 = vst.msk [vmem:[%s139 + $0x48] sm:$0xff] %vm1733, %v1702
        %1744 = vst.msk [vmem:[%s139 + $0x50] sm:$0xff] %vm1733, %v1703
        %1745 = vst.msk [vmem:[%s139 + $0x58] sm:$0xff] %vm1733, %v1704
        %1746 = vst.msk [vmem:[%s139 + $0x60] sm:$0xff] %vm1733, %v1705
        %1747 = vst.msk [vmem:[%s139 + $0x68] sm:$0xff] %vm1733, %v1706
        %1748 = vst.msk [vmem:[%s139 + $0x70] sm:$0xff] %vm1733, %v1707
        %1749 = vst.msk [vmem:[%s139 + $0x78] sm:$0xff] %vm1733, %v1708
        %1750 = vst.msk [vmem:[%s139 + $0x80] sm:$0xff] %vm1733, %v1709
        %1751 = vst.msk [vmem:[%s139 + $0x88] sm:$0xff] %vm1733, %v1710
        %1752 = vst.msk [vmem:[%s139 + $0x90] sm:$0xff] %vm1733, %v1711
        %1753 = vst.msk [vmem:[%s139 + $0x98] sm:$0xff] %vm1733, %v1712
        %1754 = vst.msk [vmem:[%s139 + $0xa0] sm:$0xff] %vm1733, %v1713
        %1755 = vst.msk [vmem:[%s139 + $0xa8] sm:$0xff] %vm1733, %v1714
        %1756 = vst.msk [vmem:[%s139 + $0xb0] sm:$0xff] %vm1733, %v1715
        %1757 = vst.msk [vmem:[%s139 + $0xb8] sm:$0xff] %vm1733, %v1716
        %1758 = vst.msk [vmem:[%s139 + $0xc0] sm:$0xff] %vm1733, %v1717
        %1759 = vst.msk [vmem:[%s139 + $0xc8] sm:$0xff] %vm1733, %v1718
        %1760 = vst.msk [vmem:[%s139 + $0xd0] sm:$0xff] %vm1733, %v1719
        %1761 = vst.msk [vmem:[%s139 + $0xd8] sm:$0xff] %vm1733, %v1720
        %1762 = vst.msk [vmem:[%s139 + $0xe0] sm:$0xff] %vm1733, %v1721
        %1763 = vst.msk [vmem:[%s139 + $0xe8] sm:$0xff] %vm1733, %v1722
        %1764 = vst.msk [vmem:[%s139 + $0xf0] sm:$0xff] %vm1733, %v1723
        %1765 = vst.msk [vmem:[%s139 + $0xf8] sm:$0xff] %vm1733, %v1724
        %1766 = vst.msk [vmem:[%s139 + $0x100] sm:$0xff] %vm1733, %v1725
        %1767 = vst.msk [vmem:[%s139 + $0x108] sm:$0xff] %vm1733, %v1726
        %1768 = vst.msk [vmem:[%s139 + $0x110] sm:$0xff] %vm1733, %v1727
        %1769 = vst.msk [vmem:[%s139 + $0x118] sm:$0xff] %vm1733, %v1728
        %1770 = vst.msk [vmem:[%s139 + $0x120] sm:$0xff] %vm1733, %v1729
        %1771 = vst.msk [vmem:[%s139 + $0x128] sm:$0xff] %vm1733, %v1730
        %1772 = vst.msk [vmem:[%s139 + $0x130] sm:$0xff] %vm1733, %v1731
        %1773 = vst.msk [vmem:[%s139 + $0x138] sm:$0xff] %vm1733, %v1732
        %s1774 = sand.u32 %s49, 1
        %s1775 = sand.u32 %s49, 1
        %s1776 = smul.addr %s1775, 320
        %s1777 = scalar_lea.vmem [#allocation4], %s1776
        // Predicated region
        $region29: #{tpu_custom_call.1} parent=23 // pred_check
          %p1778 = pneg %p59
        $region30: #{tpu_custom_call.1} parent=23 // pred_check_branch
          %1780 = sbr.rel (%p1778) target = $region32
        $region31: #{tpu_custom_call.1} parent=23 // pred_region
          %s1781 = smul.u32 40, %s15
          %s1782 = ssub.s32 150, %s1781
          %p1783 = scmp.lt.s32.totalorder %s1782, 40
          %s1784 = scalar_select %p1783, %s1782, 40
          %s1785 = smul.u32 8, %s1784
          %p1786 = scmp.ne.s32.totalorder 0, %s1785
          %s1787 = smul.addr %s1781, 8
          %s1788 = scalar_lea.vmem %s1, %s1787
          // Predicated region
          $region33: #{tpu_custom_call.1} parent=31 // pred_check
            %p1789 = pneg %p1786
          $region34: #{tpu_custom_call.1} parent=31 // pred_check_branch
            %1791 = sbr.rel (%p1789) target = $region36
          $region35: #{tpu_custom_call.1} parent=31 // pred_region
            // Predicated region
            $region37: #{tpu_custom_call.1} parent=35 // pred_check
              _
            $region38: #{tpu_custom_call.1} parent=35 // pred_check_branch
              %1793 = sbr.rel (0) target = $region40
            $region39: #{tpu_custom_call.1} parent=35 // pred_region
              // Predicated region
              $region59: #{tpu_custom_call.1} parent=39 // pred_check
                _
              $region60: #{tpu_custom_call.1} parent=39 // pred_check_branch
                %1905 = sbr.rel (0) target = $region62
              $region61: #{tpu_custom_call.1} parent=39 // pred_region
                %s1906 = sshrl.u32 %s1784, 5
                // While loop
                $region63: #{tpu_custom_call.1} parent=61 // loop_pre_header
                  _
                $region64: #{tpu_custom_call.1} parent=61 // loop_header
                  %s1908 = sphi 0, %s1910
                  %p1909 = scmp.ge.s32.totalorder %s1908, %s1906
                  %s1913 = sphi 0, %s1982
                  %s1914 = sphi %s1777, %s1985
                  %s1915 = sphi %s1788, %s1986
                $region65: #{tpu_custom_call.1} parent=61 // loop_header_branch
                  %1912 = sbr.rel (%p1909) target = $region69
                $region66: #{tpu_custom_call.1} parent=61 // loop_body
                  %v1916 = vld [vmem:[%s1914] sm:$0xff]
                  %1917 = vst [vmem:[%s1915] sm:$0xff] %v1916
                  %v1918 = vld [vmem:[%s1914 + $0x8] sm:$0xff]
                  %1919 = vst [vmem:[%s1915 + $0x8] sm:$0xff] %v1918
                  %v1920 = vld [vmem:[%s1914 + $0x10] sm:$0xff]
                  %1921 = vst [vmem:[%s1915 + $0x10] sm:$0xff] %v1920
                  %v1922 = vld [vmem:[%s1914 + $0x18] sm:$0xff]
                  %1923 = vst [vmem:[%s1915 + $0x18] sm:$0xff] %v1922
                  %v1924 = vld [vmem:[%s1914 + $0x20] sm:$0xff]
                  %1925 = vst [vmem:[%s1915 + $0x20] sm:$0xff] %v1924
                  %v1926 = vld [vmem:[%s1914 + $0x28] sm:$0xff]
                  %1927 = vst [vmem:[%s1915 + $0x28] sm:$0xff] %v1926
                  %v1928 = vld [vmem:[%s1914 + $0x30] sm:$0xff]
                  %1929 = vst [vmem:[%s1915 + $0x30] sm:$0xff] %v1928
                  %v1930 = vld [vmem:[%s1914 + $0x38] sm:$0xff]
                  %1931 = vst [vmem:[%s1915 + $0x38] sm:$0xff] %v1930
                  %v1932 = vld [vmem:[%s1914 + $0x40] sm:$0xff]
                  %1933 = vst [vmem:[%s1915 + $0x40] sm:$0xff] %v1932
                  %v1934 = vld [vmem:[%s1914 + $0x48] sm:$0xff]
                  %1935 = vst [vmem:[%s1915 + $0x48] sm:$0xff] %v1934
                  %v1936 = vld [vmem:[%s1914 + $0x50] sm:$0xff]
                  %1937 = vst [vmem:[%s1915 + $0x50] sm:$0xff] %v1936
                  %v1938 = vld [vmem:[%s1914 + $0x58] sm:$0xff]
                  %1939 = vst [vmem:[%s1915 + $0x58] sm:$0xff] %v1938
                  %v1940 = vld [vmem:[%s1914 + $0x60] sm:$0xff]
                  %1941 = vst [vmem:[%s1915 + $0x60] sm:$0xff] %v1940
                  %v1942 = vld [vmem:[%s1914 + $0x68] sm:$0xff]
                  %1943 = vst [vmem:[%s1915 + $0x68] sm:$0xff] %v1942
                  %v1944 = vld [vmem:[%s1914 + $0x70] sm:$0xff]
                  %1945 = vst [vmem:[%s1915 + $0x70] sm:$0xff] %v1944
                  %v1946 = vld [vmem:[%s1914 + $0x78] sm:$0xff]
                  %1947 = vst [vmem:[%s1915 + $0x78] sm:$0xff] %v1946
                  %v1948 = vld [vmem:[%s1914 + $0x80] sm:$0xff]
                  %1949 = vst [vmem:[%s1915 + $0x80] sm:$0xff] %v1948
                  %v1950 = vld [vmem:[%s1914 + $0x88] sm:$0xff]
                  %1951 = vst [vmem:[%s1915 + $0x88] sm:$0xff] %v1950
                  %v1952 = vld [vmem:[%s1914 + $0x90] sm:$0xff]
                  %1953 = vst [vmem:[%s1915 + $0x90] sm:$0xff] %v1952
                  %v1954 = vld [vmem:[%s1914 + $0x98] sm:$0xff]
                  %1955 = vst [vmem:[%s1915 + $0x98] sm:$0xff] %v1954
                  %v1956 = vld [vmem:[%s1914 + $0xa0] sm:$0xff]
                  %1957 = vst [vmem:[%s1915 + $0xa0] sm:$0xff] %v1956
                  %v1958 = vld [vmem:[%s1914 + $0xa8] sm:$0xff]
                  %1959 = vst [vmem:[%s1915 + $0xa8] sm:$0xff] %v1958
                  %v1960 = vld [vmem:[%s1914 + $0xb0] sm:$0xff]
                  %1961 = vst [vmem:[%s1915 + $0xb0] sm:$0xff] %v1960
                  %v1962 = vld [vmem:[%s1914 + $0xb8] sm:$0xff]
                  %1963 = vst [vmem:[%s1915 + $0xb8] sm:$0xff] %v1962
                  %v1964 = vld [vmem:[%s1914 + $0xc0] sm:$0xff]
                  %1965 = vst [vmem:[%s1915 + $0xc0] sm:$0xff] %v1964
                  %v1966 = vld [vmem:[%s1914 + $0xc8] sm:$0xff]
                  %1967 = vst [vmem:[%s1915 + $0xc8] sm:$0xff] %v1966
                  %v1968 = vld [vmem:[%s1914 + $0xd0] sm:$0xff]
                  %1969 = vst [vmem:[%s1915 + $0xd0] sm:$0xff] %v1968
                  %v1970 = vld [vmem:[%s1914 + $0xd8] sm:$0xff]
                  %1971 = vst [vmem:[%s1915 + $0xd8] sm:$0xff] %v1970
                  %v1972 = vld [vmem:[%s1914 + $0xe0] sm:$0xff]
                  %1973 = vst [vmem:[%s1915 + $0xe0] sm:$0xff] %v1972
                  %v1974 = vld [vmem:[%s1914 + $0xe8] sm:$0xff]
                  %1975 = vst [vmem:[%s1915 + $0xe8] sm:$0xff] %v1974
                  %v1976 = vld [vmem:[%s1914 + $0xf0] sm:$0xff]
                  %1977 = vst [vmem:[%s1915 + $0xf0] sm:$0xff] %v1976
                  %v1978 = vld [vmem:[%s1914 + $0xf8] sm:$0xff]
                  %1979 = vst [vmem:[%s1915 + $0xf8] sm:$0xff] %v1978
                  %s1980 = sadd.s32 1, %s1913
                  %p1981 = scmp.ge.s32.totalorder %s1980, %s1906
                  %s1982 = scalar_select %p1981, 0, %s1980
                  %s1983 = smul.u32 %s1982, 256
                  %s1984 = smul.u32 %s1982, 256
                  %s1985 = scalar_lea.vmem %s1777, %s1983 [#allocation4]
                  %s1986 = scalar_lea.vmem %s1788, %s1984
                $region67: #{tpu_custom_call.1} parent=61 // loop_footer
                  %s1910 = sadd.s32 %s1908, 1
                $region68: #{tpu_custom_call.1} parent=61 // loop_footer_branch
                  %1907 = sbr.rel target = $region64
                $region69: #{tpu_custom_call.1} parent=61 // loop_exit
                  _
                %s1987 = sshrl.u32 %s1784, 5
                %s1988 = sand.u32 %s1784, 31
                %s1989 = smul.u32 %s1987, 32
                %s1990 = smul.u32 8, %s1989
                %s1991 = scalar_lea.vmem %s1777, %s1990 [#allocation4]
                %s1992 = smul.u32 8, %s1989
                %s1993 = scalar_lea.vmem %s1788, %s1992
                // While loop
                $region70: #{tpu_custom_call.1} parent=61 // loop_pre_header
                  _
                $region71: #{tpu_custom_call.1} parent=61 // loop_header
                  %s1995 = sphi 0, %s1997
                  %p1996 = scmp.ge.s32.totalorder %s1995, %s1988
                  %s2000 = sphi 0, %s2007
                  %s2001 = sphi %s1991, %s2010
                  %s2002 = sphi %s1993, %s2011
                $region72: #{tpu_custom_call.1} parent=61 // loop_header_branch
                  %1999 = sbr.rel (%p1996) target = $region76
                $region73: #{tpu_custom_call.1} parent=61 // loop_body
                  %v2003 = vld [vmem:[%s2001] sm:$0xff]
                  %2004 = vst [vmem:[%s2002] sm:$0xff] %v2003
                  %s2005 = sadd.s32 1, %s2000
                  %p2006 = scmp.ge.s32.totalorder %s2005, %s1988
                  %s2007 = scalar_select %p2006, 0, %s2005
                  %s2008 = smul.u32 %s2007, 8
                  %s2009 = smul.u32 %s2007, 8
                  %s2010 = scalar_lea.vmem %s1991, %s2008 [#allocation4]
                  %s2011 = scalar_lea.vmem %s1993, %s2009
                $region74: #{tpu_custom_call.1} parent=61 // loop_footer
                  %s1997 = sadd.s32 %s1995, 1
                $region75: #{tpu_custom_call.1} parent=61 // loop_footer_branch
                  %1994 = sbr.rel target = $region71
                $region76: #{tpu_custom_call.1} parent=61 // loop_exit
                  _
              $region62: #{tpu_custom_call.1} parent=39 // pred_fallthru
                _
              // Predicated region
              $region77: #{tpu_custom_call.1} parent=39 // pred_check
                _
              $region78: #{tpu_custom_call.1} parent=39 // pred_check_branch
                %2013 = sbr.rel target = $region80
              $region79: #{tpu_custom_call.1} parent=39 // pred_region
                _
              $region80: #{tpu_custom_call.1} parent=39 // pred_fallthru
                _
            $region40: #{tpu_custom_call.1} parent=35 // pred_fallthru
              _
            // Predicated region
            $region41: #{tpu_custom_call.1} parent=35 // pred_check
              _
            $region42: #{tpu_custom_call.1} parent=35 // pred_check_branch
              %1795 = sbr.rel target = $region44
            $region43: #{tpu_custom_call.1} parent=35 // pred_region
              %s1797 = ssub.s32 256, 1
              %s1798 = sshrl.u32 %s1784, 5
              // While loop
              $region45: #{tpu_custom_call.1} parent=43 // loop_pre_header
                _
              $region46: #{tpu_custom_call.1} parent=43 // loop_header
                %s1800 = sphi 0, %s1802
                %p1801 = scmp.ge.s32.totalorder %s1800, %s1798
                %s1805 = sphi 0, %s1874
                %s1806 = sphi %s1777, %s1877
                %s1807 = sphi %s1788, %s1878
              $region47: #{tpu_custom_call.1} parent=43 // loop_header_branch
                %1804 = sbr.rel (%p1801) target = $region51
              $region48: #{tpu_custom_call.1} parent=43 // loop_body
                %v1808 = vld [vmem:[%s1806] sm:%s1797]
                %1809 = vst [vmem:[%s1807] sm:%s1797] %v1808
                %v1810 = vld [vmem:[%s1806 + $0x8] sm:%s1797]
                %1811 = vst [vmem:[%s1807 + $0x8] sm:%s1797] %v1810
                %v1812 = vld [vmem:[%s1806 + $0x10] sm:%s1797]
                %1813 = vst [vmem:[%s1807 + $0x10] sm:%s1797] %v1812
                %v1814 = vld [vmem:[%s1806 + $0x18] sm:%s1797]
                %1815 = vst [vmem:[%s1807 + $0x18] sm:%s1797] %v1814
                %v1816 = vld [vmem:[%s1806 + $0x20] sm:%s1797]
                %1817 = vst [vmem:[%s1807 + $0x20] sm:%s1797] %v1816
                %v1818 = vld [vmem:[%s1806 + $0x28] sm:%s1797]
                %1819 = vst [vmem:[%s1807 + $0x28] sm:%s1797] %v1818
                %v1820 = vld [vmem:[%s1806 + $0x30] sm:%s1797]
                %1821 = vst [vmem:[%s1807 + $0x30] sm:%s1797] %v1820
                %v1822 = vld [vmem:[%s1806 + $0x38] sm:%s1797]
                %1823 = vst [vmem:[%s1807 + $0x38] sm:%s1797] %v1822
                %v1824 = vld [vmem:[%s1806 + $0x40] sm:%s1797]
                %1825 = vst [vmem:[%s1807 + $0x40] sm:%s1797] %v1824
                %v1826 = vld [vmem:[%s1806 + $0x48] sm:%s1797]
                %1827 = vst [vmem:[%s1807 + $0x48] sm:%s1797] %v1826
                %v1828 = vld [vmem:[%s1806 + $0x50] sm:%s1797]
                %1829 = vst [vmem:[%s1807 + $0x50] sm:%s1797] %v1828
                %v1830 = vld [vmem:[%s1806 + $0x58] sm:%s1797]
                %1831 = vst [vmem:[%s1807 + $0x58] sm:%s1797] %v1830
                %v1832 = vld [vmem:[%s1806 + $0x60] sm:%s1797]
                %1833 = vst [vmem:[%s1807 + $0x60] sm:%s1797] %v1832
                %v1834 = vld [vmem:[%s1806 + $0x68] sm:%s1797]
                %1835 = vst [vmem:[%s1807 + $0x68] sm:%s1797] %v1834
                %v1836 = vld [vmem:[%s1806 + $0x70] sm:%s1797]
                %1837 = vst [vmem:[%s1807 + $0x70] sm:%s1797] %v1836
                %v1838 = vld [vmem:[%s1806 + $0x78] sm:%s1797]
                %1839 = vst [vmem:[%s1807 + $0x78] sm:%s1797] %v1838
                %v1840 = vld [vmem:[%s1806 + $0x80] sm:%s1797]
                %1841 = vst [vmem:[%s1807 + $0x80] sm:%s1797] %v1840
                %v1842 = vld [vmem:[%s1806 + $0x88] sm:%s1797]
                %1843 = vst [vmem:[%s1807 + $0x88] sm:%s1797] %v1842
                %v1844 = vld [vmem:[%s1806 + $0x90] sm:%s1797]
                %1845 = vst [vmem:[%s1807 + $0x90] sm:%s1797] %v1844
                %v1846 = vld [vmem:[%s1806 + $0x98] sm:%s1797]
                %1847 = vst [vmem:[%s1807 + $0x98] sm:%s1797] %v1846
                %v1848 = vld [vmem:[%s1806 + $0xa0] sm:%s1797]
                %1849 = vst [vmem:[%s1807 + $0xa0] sm:%s1797] %v1848
                %v1850 = vld [vmem:[%s1806 + $0xa8] sm:%s1797]
                %1851 = vst [vmem:[%s1807 + $0xa8] sm:%s1797] %v1850
                %v1852 = vld [vmem:[%s1806 + $0xb0] sm:%s1797]
                %1853 = vst [vmem:[%s1807 + $0xb0] sm:%s1797] %v1852
                %v1854 = vld [vmem:[%s1806 + $0xb8] sm:%s1797]
                %1855 = vst [vmem:[%s1807 + $0xb8] sm:%s1797] %v1854
                %v1856 = vld [vmem:[%s1806 + $0xc0] sm:%s1797]
                %1857 = vst [vmem:[%s1807 + $0xc0] sm:%s1797] %v1856
                %v1858 = vld [vmem:[%s1806 + $0xc8] sm:%s1797]
                %1859 = vst [vmem:[%s1807 + $0xc8] sm:%s1797] %v1858
                %v1860 = vld [vmem:[%s1806 + $0xd0] sm:%s1797]
                %1861 = vst [vmem:[%s1807 + $0xd0] sm:%s1797] %v1860
                %v1862 = vld [vmem:[%s1806 + $0xd8] sm:%s1797]
                %1863 = vst [vmem:[%s1807 + $0xd8] sm:%s1797] %v1862
                %v1864 = vld [vmem:[%s1806 + $0xe0] sm:%s1797]
                %1865 = vst [vmem:[%s1807 + $0xe0] sm:%s1797] %v1864
                %v1866 = vld [vmem:[%s1806 + $0xe8] sm:%s1797]
                %1867 = vst [vmem:[%s1807 + $0xe8] sm:%s1797] %v1866
                %v1868 = vld [vmem:[%s1806 + $0xf0] sm:%s1797]
                %1869 = vst [vmem:[%s1807 + $0xf0] sm:%s1797] %v1868
                %v1870 = vld [vmem:[%s1806 + $0xf8] sm:%s1797]
                %1871 = vst [vmem:[%s1807 + $0xf8] sm:%s1797] %v1870
                %s1872 = sadd.s32 1, %s1805
                %p1873 = scmp.ge.s32.totalorder %s1872, %s1798
                %s1874 = scalar_select %p1873, 0, %s1872
                %s1875 = smul.u32 %s1874, 256
                %s1876 = smul.u32 %s1874, 256
                %s1877 = scalar_lea.vmem %s1777, %s1875 [#allocation4]
                %s1878 = scalar_lea.vmem %s1788, %s1876
              $region49: #{tpu_custom_call.1} parent=43 // loop_footer
                %s1802 = sadd.s32 %s1800, 1
              $region50: #{tpu_custom_call.1} parent=43 // loop_footer_branch
                %1799 = sbr.rel target = $region46
              $region51: #{tpu_custom_call.1} parent=43 // loop_exit
                _
              %s1879 = sshrl.u32 %s1784, 5
              %s1880 = sand.u32 %s1784, 31
              %s1881 = smul.u32 %s1879, 32
              %s1882 = smul.u32 8, %s1881
              %s1883 = scalar_lea.vmem %s1777, %s1882 [#allocation4]
              %s1884 = smul.u32 8, %s1881
              %s1885 = scalar_lea.vmem %s1788, %s1884
              // While loop
              $region52: #{tpu_custom_call.1} parent=43 // loop_pre_header
                _
              $region53: #{tpu_custom_call.1} parent=43 // loop_header
                %s1887 = sphi 0, %s1889
                %p1888 = scmp.ge.s32.totalorder %s1887, %s1880
                %s1892 = sphi 0, %s1899
                %s1893 = sphi %s1883, %s1902
                %s1894 = sphi %s1885, %s1903
              $region54: #{tpu_custom_call.1} parent=43 // loop_header_branch
                %1891 = sbr.rel (%p1888) target = $region58
              $region55: #{tpu_custom_call.1} parent=43 // loop_body
                %v1895 = vld [vmem:[%s1893] sm:%s1797]
                %1896 = vst [vmem:[%s1894] sm:%s1797] %v1895
                %s1897 = sadd.s32 1, %s1892
                %p1898 = scmp.ge.s32.totalorder %s1897, %s1880
                %s1899 = scalar_select %p1898, 0, %s1897
                %s1900 = smul.u32 %s1899, 8
                %s1901 = smul.u32 %s1899, 8
                %s1902 = scalar_lea.vmem %s1883, %s1900 [#allocation4]
                %s1903 = scalar_lea.vmem %s1885, %s1901
              $region56: #{tpu_custom_call.1} parent=43 // loop_footer
                %s1889 = sadd.s32 %s1887, 1
              $region57: #{tpu_custom_call.1} parent=43 // loop_footer_branch
                %1886 = sbr.rel target = $region53
              $region58: #{tpu_custom_call.1} parent=43 // loop_exit
                _
            $region44: #{tpu_custom_call.1} parent=35 // pred_fallthru
              _
          $region36: #{tpu_custom_call.1} parent=31 // pred_fallthru
            _
          %2014 = vnop
        $region32: #{tpu_custom_call.1} parent=23 // pred_fallthru
          _
      $region24: #{tpu_custom_call.1} parent=5 // pred_fallthru
        _
      %p2015 = scmp.le.s32.totalorder 2, %s10
      // Predicated region
      $region81: #{tpu_custom_call.1} parent=5 // pred_check
        %p2016 = pneg %p2015
      $region82: #{tpu_custom_call.1} parent=5 // pred_check_branch
        %2018 = sbr.rel (%p2016) target = $region84
      $region83: #{tpu_custom_call.1} parent=5 // pred_region
        %s2019 = ssub.s32 %s10, 2
        // Predicated region
        $region85: #{tpu_custom_call.1} parent=83 // pred_check
          %p2020 = pneg %p65
        $region86: #{tpu_custom_call.1} parent=83 // pred_check_branch
          %2022 = sbr.rel (%p2020) target = $region88
        $region87: #{tpu_custom_call.1} parent=83 // pred_region
          %s2023 = sand.u32 %s50, 1
          %s2024 = sand.u32 %s50, 1
          %s2025 = smul.addr %s2024, 320
          %s2026 = scalar_lea.vmem [#allocation4], %s2025
        $region88: #{tpu_custom_call.1} parent=83 // pred_fallthru
          _
      $region84: #{tpu_custom_call.1} parent=5 // pred_fallthru
        _
    $region6: #{tpu_custom_call.1} parent=1 // loop_footer
      %s14 = sadd.s32 1, %s10
    $region7: #{tpu_custom_call.1} parent=1 // loop_footer_branch
      %9 = sbr.rel target = $region3
    $region8: #{tpu_custom_call.1} parent=1 // loop_exit
      _
    %2027 = vsyncpa [#allocation3], 1
    %s2028 = scalar_lea.sflag [#allocation3], 1
    %2029 = vsyncpa %s2028, 1

</llo_original>
